<compile_context>
chip_gen: v6e
topology: v6e:2x2x1
jax: 0.10.0
libtpu: 0.0.40
codegen_flags: <defaults>
</compile_context>

<pallas_src>
import numpy as np
import jax
import jax.numpy as jnp
from jax.experimental import pallas as pl
from jax.experimental.pallas import tpu as pltpu

_LANES = 128        # pad all channel dims to one full vreg lane width
_NUM_CONV = 4       # the Discriminator has 4 condensing layers


# ----------------------------- fused Pallas kernel ---------------------------

def _fused_discriminator_kernel(x_ref, w1_ref, b1_ref, w2_ref, b2_ref,
                                w3_ref, b3_ref, w4_ref, b4_ref,
                                w5bc_ref, sel_ref, b5_ref, o_ref):
    """Entire Discriminator forward on VMEM-resident data.

    x_ref    : (R1, 4*im_dim)  layer-1 2x2 patches, rows in reversed-quadtree
               (finest 2x2 digit most significant), batch-minor order.
    w1_ref   : (4*im_dim, 128) layer-1 weight, output channels padded to 128.
    wl_ref   : (4, 128, 128)   layer-l weight, one (Cin,Cout)-padded matrix per
               2x2 kernel position p = 2*kh + kw, for l = 2..4.
    bl_ref   : (1, 128)        biases, zero padded.
    w5bc_ref : (R5, 128)       Linear weight with the NCHW flatten folded in,
               broadcast over the batch-minor rows of the layer-4 output.
    sel_ref  : (N, R5)         0/1 matrix summing each image's rows.
    b5_ref   : (1, 1)          Linear bias.
    o_ref    : (N, 1)          sigmoid output.
    """
    def lrelu(y):
        return jnp.where(y > 0, y, 0.2 * y)

    def conv_block(a, w_ref, b_ref):
        # 2x2 / stride-2 conv == 4 contiguous, aligned row-block matmuls.
        rq = a.shape[0] // 4
        acc = jnp.dot(a[0:rq, :], w_ref[0], preferred_element_type=jnp.float32)
        for p in range(1, 4):
            acc = acc + jnp.dot(a[p * rq:(p + 1) * rq, :], w_ref[p],
                                preferred_element_type=jnp.float32)
        return lrelu(acc + b_ref[...])

    # Layer 1: patches were pre-extracted, so it is a single matmul.
    a = lrelu(jnp.dot(x_ref[...], w1_ref[...],
                      preferred_element_type=jnp.float32) + b1_ref[...])
    a = conv_block(a, w2_ref, b2_ref)
    a = conv_block(a, w3_ref, b3_ref)
    a = conv_block(a, w4_ref, b4_ref)

    # Head: Flatten(NCHW) + Linear + Sigmoid (flatten folded into w5bc).
    s = jnp.sum(a * w5bc_ref[...], axis=1, keepdims=True)          # (R5, 1)
    logit = jnp.dot(sel_ref[...], s,
                    preferred_element_type=jnp.float32) + b5_ref[...]
    o_ref[...] = jax.nn.sigmoid(logit)


_VMEM = pl.BlockSpec(memory_space=pltpu.MemorySpace.VMEM)


def discriminator_forward(prepped, x_nchw):
    """x_nchw: (N, im_dim, H, W) -> (N, 1); matches the PyTorch module."""
    n = x_nchw.shape[0]
    # Single gather putting the input into layer-1-patch rows (reversed
    # quadtree, batch-minor).  Replaces the per-layer 6-D transposes.
    x_patches = jnp.take(x_nchw.reshape(-1), prepped["gather_idx"], axis=0)
    args = (x_patches,
            prepped["w1"], prepped["b1"], prepped["w2"], prepped["b2"],
            prepped["w3"], prepped["b3"], prepped["w4"], prepped["b4"],
            prepped["w5bc"], prepped["sel"], prepped["b5"])
    return pl.pallas_call(
        _fused_discriminator_kernel,
        out_shape=jax.ShapeDtypeStruct((n, 1), jnp.float32),
        in_specs=[_VMEM] * len(args),
        out_specs=_VMEM,
        # TODO(synk): for large batches, add a grid over batch with
        # dimension_semantics=("parallel",) (v7x 2-TC sharding), tile rows
        # against the 64 MiB VMEM budget, and store weights in bf16.
    )(*args)


# ------------------------- parameter / index preparation ---------------------

def init_discriminator_params(key, im_dim=3, hidden_dim=4, input_shape=(32, 32)):
    """Deterministic synthetic parameters in PyTorch layouts."""
    dims = [im_dim, hidden_dim, hidden_dim * 2, hidden_dim * 4, hidden_dim * 8]
    params = {"conv_w": [], "conv_b": []}
    keys = jax.random.split(key, 2 * _NUM_CONV + 2)
    for i in range(_NUM_CONV):
        cin, cout = dims[i], dims[i + 1]
        params["conv_w"].append(
            0.1 * jax.random.normal(keys[2 * i], (cout, cin, 2, 2), jnp.float32))
        params["conv_b"].append(
            0.1 * jax.random.normal(keys[2 * i + 1], (cout,), jnp.float32))
    lin_in = input_shape[0] * input_shape[1] // 8
    params["lin_w"] = 0.05 * jax.random.normal(keys[-2], (1, lin_in), jnp.float32)
    params["lin_b"] = 0.05 * jax.random.normal(keys[-1], (1,), jnp.float32)
    return params


def _build_gather_indices(n_batch, im_dim, h, w):
    """Flat indices into x.reshape(-1) building the layer-1 patch matrix.

    Output row r = ((p2*4 + p3)*4 + p4)*S5*N + r5*N + nb  (reversed-quadtree,
    batch-minor), output col = p1*im_dim + c, where p_l = 2*kh + kw is the 2x2
    offset consumed by conv layer l and r5 is the row-major index of the
    coarse (H/16, W/16) position that survives all four convs.  With this
    ordering, layer-l's patch-p rows are the contiguous block
    [p*R/4, (p+1)*R/4) of the previous layer's output.
    """
    hc, wc = h // 16, w // 16
    s5 = hc * wc
    rows = n_batch * 64 * s5
    cols = 4 * im_dim
    idx = np.empty((rows, cols), dtype=np.int32)
    for p2 in range(4):
        for p3 in range(4):
            for p4 in range(4):
                for r5 in range(s5):
                    ci, cj = r5 // wc, r5 % wc
                    oi = ci * 8 + (p4 >> 1) * 4 + (p3 >> 1) * 2 + (p2 >> 1)
                    oj = cj * 8 + (p4 & 1) * 4 + (p3 & 1) * 2 + (p2 & 1)
                    base = (((p2 * 4 + p3) * 4 + p4) * s5 + r5) * n_batch
                    for nb in range(n_batch):
                        row = base + nb
                        for p1 in range(4):
                            i = 2 * oi + (p1 >> 1)
                            j = 2 * oj + (p1 & 1)
                            for c in range(im_dim):
                                idx[row, p1 * im_dim + c] = (
                                    ((nb * im_dim + c) * h + i) * w + j)
    return jnp.asarray(idx)


def prepare_params(params, n_batch, im_dim=3, hidden_dim=4, input_shape=(32, 32)):
    """One-time conversion of PyTorch-layout params into kernel-ready,
    128-lane-padded arrays (plus the input gather indices)."""
    h, w = input_shape
    assert h % 16 == 0 and w % 16 == 0, "input_shape must be divisible by 16"
    dims = [im_dim, hidden_dim, hidden_dim * 2, hidden_dim * 4, hidden_dim * 8]
    assert dims[-1] <= _LANES
    s5 = (h // 16) * (w // 16)
    assert params["lin_w"].shape[1] == dims[-1] * s5

    prepped = {"gather_idx": _build_gather_indices(n_batch, im_dim, h, w)}

    # Layer 1: (4*Cin, 128) weight; output channels zero padded to 128 lanes.
    w1 = jnp.transpose(params["conv_w"][0], (2, 3, 1, 0)).reshape(4 * dims[0], dims[1])
    prepped["w1"] = jnp.zeros((4 * dims[0], _LANES), jnp.float32).at[:, :dims[1]].set(w1)
    prepped["b1"] = (jnp.zeros((1, _LANES), jnp.float32)
                     .at[0, :dims[1]].set(params["conv_b"][0]))

    # Layers 2..4: per 2x2-position weight matrices, padded to (4, 128, 128).
    for l in range(2, _NUM_CONV + 1):
        cin, cout = dims[l - 1], dims[l]
        wl = jnp.transpose(params["conv_w"][l - 1], (2, 3, 1, 0)).reshape(4, cin, cout)
        prepped[f"w{l}"] = (jnp.zeros((4, _LANES, _LANES), jnp.float32)
                            .at[:, :cin, :cout].set(wl))
        prepped[f"b{l}"] = (jnp.zeros((1, _LANES), jnp.float32)
                            .at[0, :cout].set(params["conv_b"][l - 1]))

    # Head: fold the PyTorch NCHW flatten (feature = c*S5 + r5) into the
    # weight; broadcast over the batch-minor rows of the layer-4 output.
    c4 = dims[-1]
    lin_w = params["lin_w"].reshape(c4, s5)                           # [c, r5]
    w5 = jnp.repeat(jnp.transpose(lin_w, (1, 0)), n_batch, axis=0)    # (S5*N, c4)
    prepped["w5bc"] = (jnp.zeros((s5 * n_batch, _LANES), jnp.float32)
                       .at[:, :c4].set(w5))
    sel = (np.arange(s5 * n_batch)[None, :] % n_batch
           == np.arange(n_batch)[:, None]).astype(np.float32)
    prepped["sel"] = jnp.asarray(sel)
    prepped["b5"] = params["lin_b"].reshape(1, 1).astype(jnp.float32)
    return prepped


# --------------------------- pure-JAX reference check ------------------------

def _reference_forward(params, x_nchw):
    """Non-Pallas forward matching the PyTorch module (for verification)."""
    hp = jax.lax.Precision.HIGHEST
    x = jnp.transpose(x_nchw, (0, 2, 3, 1))                   # NCHW -> NHWC
    for w_c, b_c in zip(params["conv_w"], params["conv_b"]):
        n, h, w, cin = x.shape
        cout = w_c.shape[0]
        patches = (x.reshape(n, h // 2, 2, w // 2, 2, cin)
                   .transpose(0, 1, 3, 2, 4, 5)
                   .reshape(n, h // 2, w // 2, 4 * cin))
        w_mat = jnp.transpose(w_c, (2, 3, 1, 0)).reshape(4 * cin, cout)
        y = jnp.einsum("nhwk,kc->nhwc", patches, w_mat, precision=hp) + b_c
        x = jnp.where(y > 0, y, 0.2 * y)
    flat = jnp.transpose(x, (0, 3, 1, 2)).reshape(x.shape[0], -1)   # NCHW flatten
    logit = jnp.dot(flat, params["lin_w"].T, precision=hp) + params["lin_b"]
    return jax.nn.sigmoid(logit)


# ---------------------------------- main --------------------------------------

if __name__ == "__main__":
    key = jax.random.PRNGKey(0)
    k_param, k_input = jax.random.split(key)

    # Small config: im_dim=3, hidden_dim=4, input 32x32, batch 2
    #   (3,32,32) -> (4,16,16) -> (8,8,8) -> (16,4,4) -> (32,2,2) -> 128 -> 1
    im_dim, hidden_dim, input_shape, batch = 3, 4, (32, 32), 2

    params = init_discriminator_params(k_param, im_dim, hidden_dim, input_shape)
    prepped = prepare_params(params, batch, im_dim, hidden_dim, input_shape)
    x = jax.random.normal(k_input, (batch, im_dim, *input_shape), jnp.float32)

    fwd = jax.jit(discriminator_forward)
    out = jax.block_until_ready(fwd(prepped, x))
    assert out.shape == (batch, 1)

    ref = jax.block_until_ready(_reference_forward(params, x))
    assert jnp.allclose(out, ref, atol=5e-3), (out, ref)
    print("KERNEL_OK")
</pallas_src>

<mosaic_0001>
module attributes {stable_mosaic.version = 11 : i64} {
  func.func @_fused_discriminator_kernel(%arg0: memref<512x12xf32, #tpu.memory_space<vmem>>, %arg1: memref<12x128xf32, #tpu.memory_space<vmem>>, %arg2: memref<1x128xf32, #tpu.memory_space<vmem>>, %arg3: memref<4x128x128xf32, #tpu.memory_space<vmem>>, %arg4: memref<1x128xf32, #tpu.memory_space<vmem>>, %arg5: memref<4x128x128xf32, #tpu.memory_space<vmem>>, %arg6: memref<1x128xf32, #tpu.memory_space<vmem>>, %arg7: memref<4x128x128xf32, #tpu.memory_space<vmem>>, %arg8: memref<1x128xf32, #tpu.memory_space<vmem>>, %arg9: memref<8x128xf32, #tpu.memory_space<vmem>>, %arg10: memref<2x8xf32, #tpu.memory_space<vmem>>, %arg11: memref<1x1xf32, #tpu.memory_space<vmem>>, %arg12: memref<2x1xf32, #tpu.memory_space<vmem>>) attributes {dimension_semantics = [], scalar_prefetch = 0 : i64, scratch_operands = 0 : i64, tpu.core_type = #tpu.core_type<tc>} {
    %c0 = arith.constant 0 : index
    %c0_0 = arith.constant 0 : index
    %0 = vector.load %arg0[%c0, %c0_0] : memref<512x12xf32, #tpu.memory_space<vmem>>, vector<512x12xf32>
    %c0_1 = arith.constant 0 : index
    %c0_2 = arith.constant 0 : index
    %1 = vector.load %arg1[%c0_1, %c0_2] : memref<12x128xf32, #tpu.memory_space<vmem>>, vector<12x128xf32>
    %cst = arith.constant dense<0.000000e+00> : vector<512x128xf32>
    %2 = tpu.matmul %0, %1, %cst {dimension_numbers = #tpu.dot_dimension_numbers<[1], [0], [0], [1], [0, 0, 1, 1], [], []>} : vector<512x12xf32>, vector<12x128xf32>, vector<512x128xf32> -> vector<512x128xf32>
    %c0_3 = arith.constant 0 : index
    %c0_4 = arith.constant 0 : index
    %3 = vector.load %arg2[%c0_3, %c0_4] : memref<1x128xf32, #tpu.memory_space<vmem>>, vector<1x128xf32>
    %4 = vector.broadcast %3 : vector<1x128xf32> to vector<512x128xf32>
    %5 = arith.addf %2, %4 : vector<512x128xf32>
    %cst_5 = arith.constant 0.000000e+00 : f32
    %6 = vector.broadcast %cst_5 : f32 to vector<512x128xf32>
    %7 = arith.cmpf ogt, %5, %6 : vector<512x128xf32>
    %cst_6 = arith.constant 2.000000e-01 : f32
    %8 = vector.broadcast %cst_6 : f32 to vector<512x128xf32>
    %9 = arith.mulf %8, %5 : vector<512x128xf32>
    %10 = arith.select %7, %5, %9 : vector<512x128xi1>, vector<512x128xf32>
    %11 = vector.extract_strided_slice %10 {offsets = [0, 0], sizes = [128, 128], strides = [1, 1]} : vector<512x128xf32> to vector<128x128xf32>
    %c0_7 = arith.constant 0 : index
    %c0_8 = arith.constant 0 : index
    %c0_9 = arith.constant 0 : index
    %12 = vector.load %arg3[%c0_7, %c0_8, %c0_9] : memref<4x128x128xf32, #tpu.memory_space<vmem>>, vector<1x128x128xf32>
    %13 = vector.shape_cast %12 : vector<1x128x128xf32> to vector<128x128xf32>
    %cst_10 = arith.constant dense<0.000000e+00> : vector<128x128xf32>
    %14 = tpu.matmul %11, %13, %cst_10 {dimension_numbers = #tpu.dot_dimension_numbers<[1], [0], [0], [1], [0, 0, 1, 1], [], []>} : vector<128x128xf32>, vector<128x128xf32>, vector<128x128xf32> -> vector<128x128xf32>
    %15 = vector.extract_strided_slice %10 {offsets = [128, 0], sizes = [128, 128], strides = [1, 1]} : vector<512x128xf32> to vector<128x128xf32>
    %c1 = arith.constant 1 : index
    %c0_11 = arith.constant 0 : index
    %c0_12 = arith.constant 0 : index
    %16 = vector.load %arg3[%c1, %c0_11, %c0_12] : memref<4x128x128xf32, #tpu.memory_space<vmem>>, vector<1x128x128xf32>
    %17 = vector.shape_cast %16 : vector<1x128x128xf32> to vector<128x128xf32>
    %cst_13 = arith.constant dense<0.000000e+00> : vector<128x128xf32>
    %18 = tpu.matmul %15, %17, %cst_13 {dimension_numbers = #tpu.dot_dimension_numbers<[1], [0], [0], [1], [0, 0, 1, 1], [], []>} : vector<128x128xf32>, vector<128x128xf32>, vector<128x128xf32> -> vector<128x128xf32>
    %19 = arith.addf %14, %18 : vector<128x128xf32>
    %20 = vector.extract_strided_slice %10 {offsets = [256, 0], sizes = [128, 128], strides = [1, 1]} : vector<512x128xf32> to vector<128x128xf32>
    %c2 = arith.constant 2 : index
    %c0_14 = arith.constant 0 : index
    %c0_15 = arith.constant 0 : index
    %21 = vector.load %arg3[%c2, %c0_14, %c0_15] : memref<4x128x128xf32, #tpu.memory_space<vmem>>, vector<1x128x128xf32>
    %22 = vector.shape_cast %21 : vector<1x128x128xf32> to vector<128x128xf32>
    %cst_16 = arith.constant dense<0.000000e+00> : vector<128x128xf32>
    %23 = tpu.matmul %20, %22, %cst_16 {dimension_numbers = #tpu.dot_dimension_numbers<[1], [0], [0], [1], [0, 0, 1, 1], [], []>} : vector<128x128xf32>, vector<128x128xf32>, vector<128x128xf32> -> vector<128x128xf32>
    %24 = arith.addf %19, %23 : vector<128x128xf32>
    %25 = vector.extract_strided_slice %10 {offsets = [384, 0], sizes = [128, 128], strides = [1, 1]} : vector<512x128xf32> to vector<128x128xf32>
    %c3 = arith.constant 3 : index
    %c0_17 = arith.constant 0 : index
    %c0_18 = arith.constant 0 : index
    %26 = vector.load %arg3[%c3, %c0_17, %c0_18] : memref<4x128x128xf32, #tpu.memory_space<vmem>>, vector<1x128x128xf32>
    %27 = vector.shape_cast %26 : vector<1x128x128xf32> to vector<128x128xf32>
    %cst_19 = arith.constant dense<0.000000e+00> : vector<128x128xf32>
    %28 = tpu.matmul %25, %27, %cst_19 {dimension_numbers = #tpu.dot_dimension_numbers<[1], [0], [0], [1], [0, 0, 1, 1], [], []>} : vector<128x128xf32>, vector<128x128xf32>, vector<128x128xf32> -> vector<128x128xf32>
    %29 = arith.addf %24, %28 : vector<128x128xf32>
    %c0_20 = arith.constant 0 : index
    %c0_21 = arith.constant 0 : index
    %30 = vector.load %arg4[%c0_20, %c0_21] : memref<1x128xf32, #tpu.memory_space<vmem>>, vector<1x128xf32>
    %31 = vector.broadcast %30 : vector<1x128xf32> to vector<128x128xf32>
    %32 = arith.addf %29, %31 : vector<128x128xf32>
    %cst_22 = arith.constant 0.000000e+00 : f32
    %33 = vector.broadcast %cst_22 : f32 to vector<128x128xf32>
    %34 = arith.cmpf ogt, %32, %33 : vector<128x128xf32>
    %cst_23 = arith.constant 2.000000e-01 : f32
    %35 = vector.broadcast %cst_23 : f32 to vector<128x128xf32>
    %36 = arith.mulf %35, %32 : vector<128x128xf32>
    %37 = arith.select %34, %32, %36 : vector<128x128xi1>, vector<128x128xf32>
    %38 = vector.extract_strided_slice %37 {offsets = [0, 0], sizes = [32, 128], strides = [1, 1]} : vector<128x128xf32> to vector<32x128xf32>
    %c0_24 = arith.constant 0 : index
    %c0_25 = arith.constant 0 : index
    %c0_26 = arith.constant 0 : index
    %39 = vector.load %arg5[%c0_24, %c0_25, %c0_26] : memref<4x128x128xf32, #tpu.memory_space<vmem>>, vector<1x128x128xf32>
    %40 = vector.shape_cast %39 : vector<1x128x128xf32> to vector<128x128xf32>
    %cst_27 = arith.constant dense<0.000000e+00> : vector<32x128xf32>
    %41 = tpu.matmul %38, %40, %cst_27 {dimension_numbers = #tpu.dot_dimension_numbers<[1], [0], [0], [1], [0, 0, 1, 1], [], []>} : vector<32x128xf32>, vector<128x128xf32>, vector<32x128xf32> -> vector<32x128xf32>
    %42 = vector.extract_strided_slice %37 {offsets = [32, 0], sizes = [32, 128], strides = [1, 1]} : vector<128x128xf32> to vector<32x128xf32>
    %c1_28 = arith.constant 1 : index
    %c0_29 = arith.constant 0 : index
    %c0_30 = arith.constant 0 : index
    %43 = vector.load %arg5[%c1_28, %c0_29, %c0_30] : memref<4x128x128xf32, #tpu.memory_space<vmem>>, vector<1x128x128xf32>
    %44 = vector.shape_cast %43 : vector<1x128x128xf32> to vector<128x128xf32>
    %cst_31 = arith.constant dense<0.000000e+00> : vector<32x128xf32>
    %45 = tpu.matmul %42, %44, %cst_31 {dimension_numbers = #tpu.dot_dimension_numbers<[1], [0], [0], [1], [0, 0, 1, 1], [], []>} : vector<32x128xf32>, vector<128x128xf32>, vector<32x128xf32> -> vector<32x128xf32>
    %46 = arith.addf %41, %45 : vector<32x128xf32>
    %47 = vector.extract_strided_slice %37 {offsets = [64, 0], sizes = [32, 128], strides = [1, 1]} : vector<128x128xf32> to vector<32x128xf32>
    %c2_32 = arith.constant 2 : index
    %c0_33 = arith.constant 0 : index
    %c0_34 = arith.constant 0 : index
    %48 = vector.load %arg5[%c2_32, %c0_33, %c0_34] : memref<4x128x128xf32, #tpu.memory_space<vmem>>, vector<1x128x128xf32>
    %49 = vector.shape_cast %48 : vector<1x128x128xf32> to vector<128x128xf32>
    %cst_35 = arith.constant dense<0.000000e+00> : vector<32x128xf32>
    %50 = tpu.matmul %47, %49, %cst_35 {dimension_numbers = #tpu.dot_dimension_numbers<[1], [0], [0], [1], [0, 0, 1, 1], [], []>} : vector<32x128xf32>, vector<128x128xf32>, vector<32x128xf32> -> vector<32x128xf32>
    %51 = arith.addf %46, %50 : vector<32x128xf32>
    %52 = vector.extract_strided_slice %37 {offsets = [96, 0], sizes = [32, 128], strides = [1, 1]} : vector<128x128xf32> to vector<32x128xf32>
    %c3_36 = arith.constant 3 : index
    %c0_37 = arith.constant 0 : index
    %c0_38 = arith.constant 0 : index
    %53 = vector.load %arg5[%c3_36, %c0_37, %c0_38] : memref<4x128x128xf32, #tpu.memory_space<vmem>>, vector<1x128x128xf32>
    %54 = vector.shape_cast %53 : vector<1x128x128xf32> to vector<128x128xf32>
    %cst_39 = arith.constant dense<0.000000e+00> : vector<32x128xf32>
    %55 = tpu.matmul %52, %54, %cst_39 {dimension_numbers = #tpu.dot_dimension_numbers<[1], [0], [0], [1], [0, 0, 1, 1], [], []>} : vector<32x128xf32>, vector<128x128xf32>, vector<32x128xf32> -> vector<32x128xf32>
    %56 = arith.addf %51, %55 : vector<32x128xf32>
    %c0_40 = arith.constant 0 : index
    %c0_41 = arith.constant 0 : index
    %57 = vector.load %arg6[%c0_40, %c0_41] : memref<1x128xf32, #tpu.memory_space<vmem>>, vector<1x128xf32>
    %58 = vector.broadcast %57 : vector<1x128xf32> to vector<32x128xf32>
    %59 = arith.addf %56, %58 : vector<32x128xf32>
    %cst_42 = arith.constant 0.000000e+00 : f32
    %60 = vector.broadcast %cst_42 : f32 to vector<32x128xf32>
    %61 = arith.cmpf ogt, %59, %60 : vector<32x128xf32>
    %cst_43 = arith.constant 2.000000e-01 : f32
    %62 = vector.broadcast %cst_43 : f32 to vector<32x128xf32>
    %63 = arith.mulf %62, %59 : vector<32x128xf32>
    %64 = arith.select %61, %59, %63 : vector<32x128xi1>, vector<32x128xf32>
    %65 = vector.extract_strided_slice %64 {offsets = [0, 0], sizes = [8, 128], strides = [1, 1]} : vector<32x128xf32> to vector<8x128xf32>
    %c0_44 = arith.constant 0 : index
    %c0_45 = arith.constant 0 : index
    %c0_46 = arith.constant 0 : index
    %66 = vector.load %arg7[%c0_44, %c0_45, %c0_46] : memref<4x128x128xf32, #tpu.memory_space<vmem>>, vector<1x128x128xf32>
    %67 = vector.shape_cast %66 : vector<1x128x128xf32> to vector<128x128xf32>
    %cst_47 = arith.constant dense<0.000000e+00> : vector<8x128xf32>
    %68 = tpu.matmul %65, %67, %cst_47 {dimension_numbers = #tpu.dot_dimension_numbers<[1], [0], [0], [1], [0, 0, 1, 1], [], []>} : vector<8x128xf32>, vector<128x128xf32>, vector<8x128xf32> -> vector<8x128xf32>
    %69 = vector.extract_strided_slice %64 {offsets = [8, 0], sizes = [8, 128], strides = [1, 1]} : vector<32x128xf32> to vector<8x128xf32>
    %c1_48 = arith.constant 1 : index
    %c0_49 = arith.constant 0 : index
    %c0_50 = arith.constant 0 : index
    %70 = vector.load %arg7[%c1_48, %c0_49, %c0_50] : memref<4x128x128xf32, #tpu.memory_space<vmem>>, vector<1x128x128xf32>
    %71 = vector.shape_cast %70 : vector<1x128x128xf32> to vector<128x128xf32>
    %cst_51 = arith.constant dense<0.000000e+00> : vector<8x128xf32>
    %72 = tpu.matmul %69, %71, %cst_51 {dimension_numbers = #tpu.dot_dimension_numbers<[1], [0], [0], [1], [0, 0, 1, 1], [], []>} : vector<8x128xf32>, vector<128x128xf32>, vector<8x128xf32> -> vector<8x128xf32>
    %73 = arith.addf %68, %72 : vector<8x128xf32>
    %74 = vector.extract_strided_slice %64 {offsets = [16, 0], sizes = [8, 128], strides = [1, 1]} : vector<32x128xf32> to vector<8x128xf32>
    %c2_52 = arith.constant 2 : index
    %c0_53 = arith.constant 0 : index
    %c0_54 = arith.constant 0 : index
    %75 = vector.load %arg7[%c2_52, %c0_53, %c0_54] : memref<4x128x128xf32, #tpu.memory_space<vmem>>, vector<1x128x128xf32>
    %76 = vector.shape_cast %75 : vector<1x128x128xf32> to vector<128x128xf32>
    %cst_55 = arith.constant dense<0.000000e+00> : vector<8x128xf32>
    %77 = tpu.matmul %74, %76, %cst_55 {dimension_numbers = #tpu.dot_dimension_numbers<[1], [0], [0], [1], [0, 0, 1, 1], [], []>} : vector<8x128xf32>, vector<128x128xf32>, vector<8x128xf32> -> vector<8x128xf32>
    %78 = arith.addf %73, %77 : vector<8x128xf32>
    %79 = vector.extract_strided_slice %64 {offsets = [24, 0], sizes = [8, 128], strides = [1, 1]} : vector<32x128xf32> to vector<8x128xf32>
    %c3_56 = arith.constant 3 : index
    %c0_57 = arith.constant 0 : index
    %c0_58 = arith.constant 0 : index
    %80 = vector.load %arg7[%c3_56, %c0_57, %c0_58] : memref<4x128x128xf32, #tpu.memory_space<vmem>>, vector<1x128x128xf32>
    %81 = vector.shape_cast %80 : vector<1x128x128xf32> to vector<128x128xf32>
    %cst_59 = arith.constant dense<0.000000e+00> : vector<8x128xf32>
    %82 = tpu.matmul %79, %81, %cst_59 {dimension_numbers = #tpu.dot_dimension_numbers<[1], [0], [0], [1], [0, 0, 1, 1], [], []>} : vector<8x128xf32>, vector<128x128xf32>, vector<8x128xf32> -> vector<8x128xf32>
    %83 = arith.addf %78, %82 : vector<8x128xf32>
    %c0_60 = arith.constant 0 : index
    %c0_61 = arith.constant 0 : index
    %84 = vector.load %arg8[%c0_60, %c0_61] : memref<1x128xf32, #tpu.memory_space<vmem>>, vector<1x128xf32>
    %85 = vector.broadcast %84 : vector<1x128xf32> to vector<8x128xf32>
    %86 = arith.addf %83, %85 : vector<8x128xf32>
    %cst_62 = arith.constant 0.000000e+00 : f32
    %87 = vector.broadcast %cst_62 : f32 to vector<8x128xf32>
    %88 = arith.cmpf ogt, %86, %87 : vector<8x128xf32>
    %cst_63 = arith.constant 2.000000e-01 : f32
    %89 = vector.broadcast %cst_63 : f32 to vector<8x128xf32>
    %90 = arith.mulf %89, %86 : vector<8x128xf32>
    %91 = arith.select %88, %86, %90 : vector<8x128xi1>, vector<8x128xf32>
    %c0_64 = arith.constant 0 : index
    %c0_65 = arith.constant 0 : index
    %92 = vector.load %arg9[%c0_64, %c0_65] : memref<8x128xf32, #tpu.memory_space<vmem>>, vector<8x128xf32>
    %93 = arith.mulf %91, %92 : vector<8x128xf32>
    %cst_66 = arith.constant dense<0.000000e+00> : vector<8xf32>
    %94 = vector.multi_reduction <add>, %93, %cst_66 [1] : vector<8x128xf32> to vector<8xf32>
    %95 = vector.shape_cast %94 : vector<8xf32> to vector<8x1xf32>
    %c0_67 = arith.constant 0 : index
    %c0_68 = arith.constant 0 : index
    %96 = vector.load %arg10[%c0_67, %c0_68] : memref<2x8xf32, #tpu.memory_space<vmem>>, vector<2x8xf32>
    %cst_69 = arith.constant dense<0.000000e+00> : vector<2x1xf32>
    %97 = tpu.matmul %96, %95, %cst_69 {dimension_numbers = #tpu.dot_dimension_numbers<[1], [0], [0], [1], [0, 0, 1, 1], [], []>} : vector<2x8xf32>, vector<8x1xf32>, vector<2x1xf32> -> vector<2x1xf32>
    %c0_70 = arith.constant 0 : index
    %c0_71 = arith.constant 0 : index
    %98 = vector.load %arg11[%c0_70, %c0_71] : memref<1x1xf32, #tpu.memory_space<vmem>>, vector<1x1xf32>
    %99 = vector.broadcast %98 : vector<1x1xf32> to vector<2x1xf32>
    %100 = arith.addf %97, %99 : vector<2x1xf32>
    %101 = arith.negf %100 : vector<2x1xf32>
    %102 = math.exp %101 : vector<2x1xf32>
    %cst_72 = arith.constant 1.000000e+00 : f32
    %103 = vector.broadcast %cst_72 : f32 to vector<2x1xf32>
    %104 = arith.addf %103, %102 : vector<2x1xf32>
    %105 = arith.divf %103, %104 : vector<2x1xf32>
    %c0_73 = arith.constant 0 : index
    %c0_74 = arith.constant 0 : index
    %106 = vector.load %arg12[%c0_73, %c0_74] : memref<2x1xf32, #tpu.memory_space<vmem>>, vector<2x1xf32>
    tpu.vector_store %arg12[%c0_73, %c0_74], %105 {strides = array<i32>} : memref<2x1xf32, #tpu.memory_space<vmem>>, vector<2x1xf32>,
    return
  }
}

</mosaic_0001>

<llo_original>
// kernel: discriminator_forward.1
$region0: #{discriminator_forward.1}
  #allocation0 [shape = 'u32[]', space=smem, size = 0x4, offset = 0x4, fixed_abs, tag = 'smem constant byte address 0x4 - core index']
  #allocation1 [shape = 'u32[144,128]{1,0:T(1,128)}', space=vmem, size = 0x12000, scoped, tag = 'internal scratch']
  #allocation2 [shape = 'f32[1,1]{1,0:T(1,128)S(1)}', space=vmem, size = 0x200, scoped, tag = 'scoped memory for discriminator_forward.1']
  %s0 = inlined_call_operand.vmem [shape: f32[512,12], index: 0, kind: input, shape index: {}]
  %s1 = inlined_call_operand.vmem [shape: f32[12,128], index: 1, kind: input, shape index: {}]
  %s2 = inlined_call_operand.vmem [shape: f32[1,128], index: 2, kind: input, shape index: {}]
  %s3 = inlined_call_operand.vmem [shape: f32[4,128,128], index: 3, kind: input, shape index: {}]
  %s4 = inlined_call_operand.vmem [shape: f32[1,128], index: 4, kind: input, shape index: {}]
  %s5 = inlined_call_operand.vmem [shape: f32[4,128,128], index: 5, kind: input, shape index: {}]
  %s6 = inlined_call_operand.vmem [shape: f32[1,128], index: 6, kind: input, shape index: {}]
  %s7 = inlined_call_operand.vmem [shape: f32[4,128,128], index: 7, kind: input, shape index: {}]
  %s8 = inlined_call_operand.vmem [shape: f32[1,128], index: 8, kind: input, shape index: {}]
  %s9 = inlined_call_operand.vmem [shape: f32[8,128], index: 9, kind: input, shape index: {}]
  %s10 = inlined_call_operand.vmem [shape: f32[2,8], index: 10, kind: input, shape index: {}]
  %s11 = inlined_call_operand.<no memory space> [shape: f32[1,1], index: 11, kind: input, shape index: {}]
  %s12 = inlined_call_operand.vmem [shape: f32[2,1], index: 12, kind: output, shape index: {}]
  %s13 = sld [smem:[#allocation0]]
  $region58: #{discriminator_forward.1} parent=0
    _
  %s15 = ssub.s32 1, %s13
  %s16 = scalar_select 0, %s15, %s13
  %v17 = vstv %s11
  %18 = vst [vmem:[#allocation2] sm:$0x1] %v17
  // Predicated region
  $region2: #{discriminator_forward.1} parent=0 // pred_check
    _
  $region3: #{discriminator_forward.1} parent=0 // pred_check_branch
    %20 = sbr.rel (0) target = $region5
  $region4: #{discriminator_forward.1} parent=0 // pred_region
    _
  $region5: #{discriminator_forward.1} parent=0 // pred_fallthru
    _
  // Predicated region
  $region6: #{discriminator_forward.1} parent=0 // pred_check
    _
  $region7: #{discriminator_forward.1} parent=0 // pred_check_branch
    %22 = sbr.rel (0) target = $region9
  $region8: #{discriminator_forward.1} parent=0 // pred_region
    _
  $region9: #{discriminator_forward.1} parent=0 // pred_fallthru
    _
  // Predicated region
  $region10: #{discriminator_forward.1} parent=0 // pred_check
    _
  $region11: #{discriminator_forward.1} parent=0 // pred_check_branch
    %24 = sbr.rel (0) target = $region13
  $region12: #{discriminator_forward.1} parent=0 // pred_region
    _
  $region13: #{discriminator_forward.1} parent=0 // pred_fallthru
    _
  // Predicated region
  $region14: #{discriminator_forward.1} parent=0 // pred_check
    _
  $region15: #{discriminator_forward.1} parent=0 // pred_check_branch
    %26 = sbr.rel (0) target = $region17
  $region16: #{discriminator_forward.1} parent=0 // pred_region
    _
  $region17: #{discriminator_forward.1} parent=0 // pred_fallthru
    _
  // Predicated region
  $region18: #{discriminator_forward.1} parent=0 // pred_check
    _
  $region19: #{discriminator_forward.1} parent=0 // pred_check_branch
    %28 = sbr.rel (0) target = $region21
  $region20: #{discriminator_forward.1} parent=0 // pred_region
    _
  $region21: #{discriminator_forward.1} parent=0 // pred_fallthru
    _
  // Predicated region
  $region22: #{discriminator_forward.1} parent=0 // pred_check
    _
  $region23: #{discriminator_forward.1} parent=0 // pred_check_branch
    %30 = sbr.rel (0) target = $region25
  $region24: #{discriminator_forward.1} parent=0 // pred_region
    _
  $region25: #{discriminator_forward.1} parent=0 // pred_fallthru
    _
  // Predicated region
  $region26: #{discriminator_forward.1} parent=0 // pred_check
    _
  $region27: #{discriminator_forward.1} parent=0 // pred_check_branch
    %32 = sbr.rel (0) target = $region29
  $region28: #{discriminator_forward.1} parent=0 // pred_region
    _
  $region29: #{discriminator_forward.1} parent=0 // pred_fallthru
    _
  // Predicated region
  $region30: #{discriminator_forward.1} parent=0 // pred_check
    _
  $region31: #{discriminator_forward.1} parent=0 // pred_check_branch
    %34 = sbr.rel (0) target = $region33
  $region32: #{discriminator_forward.1} parent=0 // pred_region
    _
  $region33: #{discriminator_forward.1} parent=0 // pred_fallthru
    _
  // Predicated region
  $region34: #{discriminator_forward.1} parent=0 // pred_check
    _
  $region35: #{discriminator_forward.1} parent=0 // pred_check_branch
    %36 = sbr.rel (0) target = $region37
  $region36: #{discriminator_forward.1} parent=0 // pred_region
    _
  $region37: #{discriminator_forward.1} parent=0 // pred_fallthru
    _
  // Predicated region
  $region38: #{discriminator_forward.1} parent=0 // pred_check
    _
  $region39: #{discriminator_forward.1} parent=0 // pred_check_branch
    %38 = sbr.rel (0) target = $region41
  $region40: #{discriminator_forward.1} parent=0 // pred_region
    _
  $region41: #{discriminator_forward.1} parent=0 // pred_fallthru
    _
  // Predicated region
  $region42: #{discriminator_forward.1} parent=0 // pred_check
    _
  $region43: #{discriminator_forward.1} parent=0 // pred_check_branch
    %40 = sbr.rel (0) target = $region45
  $region44: #{discriminator_forward.1} parent=0 // pred_region
    _
  $region45: #{discriminator_forward.1} parent=0 // pred_fallthru
    _
  // Predicated region
  $region46: #{discriminator_forward.1} parent=0 // pred_check
    _
  $region47: #{discriminator_forward.1} parent=0 // pred_check_branch
    %42 = sbr.rel (0) target = $region49
  $region48: #{discriminator_forward.1} parent=0 // pred_region
    _
  $region49: #{discriminator_forward.1} parent=0 // pred_fallthru
    _
  %v43 = vld [vmem:[%s0] sm:$0xff]
  %v44 = vld [vmem:[%s0 + $0x8] sm:$0xff]
  %v45 = vld [vmem:[%s0 + $0x10] sm:$0xff]
  %v46 = vld [vmem:[%s0 + $0x18] sm:$0xff]
  %v47 = vld [vmem:[%s0 + $0x20] sm:$0xff]
  %v48 = vld [vmem:[%s0 + $0x28] sm:$0xff]
  %v49 = vld [vmem:[%s0 + $0x30] sm:$0xff]
  %v50 = vld [vmem:[%s0 + $0x38] sm:$0xff]
  %v51 = vld [vmem:[%s0 + $0x40] sm:$0xff]
  %v52 = vld [vmem:[%s0 + $0x48] sm:$0xff]
  %v53 = vld [vmem:[%s0 + $0x50] sm:$0xff]
  %v54 = vld [vmem:[%s0 + $0x58] sm:$0xff]
  %v55 = vld [vmem:[%s0 + $0x60] sm:$0xff]
  %v56 = vld [vmem:[%s0 + $0x68] sm:$0xff]
  %v57 = vld [vmem:[%s0 + $0x70] sm:$0xff]
  %v58 = vld [vmem:[%s0 + $0x78] sm:$0xff]
  %v59 = vld [vmem:[%s0 + $0x80] sm:$0xff]
  %v60 = vld [vmem:[%s0 + $0x88] sm:$0xff]
  %v61 = vld [vmem:[%s0 + $0x90] sm:$0xff]
  %v62 = vld [vmem:[%s0 + $0x98] sm:$0xff]
  %v63 = vld [vmem:[%s0 + $0xa0] sm:$0xff]
  %v64 = vld [vmem:[%s0 + $0xa8] sm:$0xff]
  %v65 = vld [vmem:[%s0 + $0xb0] sm:$0xff]
  %v66 = vld [vmem:[%s0 + $0xb8] sm:$0xff]
  %v67 = vld [vmem:[%s0 + $0xc0] sm:$0xff]
  %v68 = vld [vmem:[%s0 + $0xc8] sm:$0xff]
  %v69 = vld [vmem:[%s0 + $0xd0] sm:$0xff]
  %v70 = vld [vmem:[%s0 + $0xd8] sm:$0xff]
  %v71 = vld [vmem:[%s0 + $0xe0] sm:$0xff]
  %v72 = vld [vmem:[%s0 + $0xe8] sm:$0xff]
  %v73 = vld [vmem:[%s0 + $0xf0] sm:$0xff]
  %v74 = vld [vmem:[%s0 + $0xf8] sm:$0xff]
  %v75 = vld [vmem:[%s0 + $0x100] sm:$0xff]
  %v76 = vld [vmem:[%s0 + $0x108] sm:$0xff]
  %v77 = vld [vmem:[%s0 + $0x110] sm:$0xff]
  %v78 = vld [vmem:[%s0 + $0x118] sm:$0xff]
  %v79 = vld [vmem:[%s0 + $0x120] sm:$0xff]
  %v80 = vld [vmem:[%s0 + $0x128] sm:$0xff]
  %v81 = vld [vmem:[%s0 + $0x130] sm:$0xff]
  %v82 = vld [vmem:[%s0 + $0x138] sm:$0xff]
  %v83 = vld [vmem:[%s0 + $0x140] sm:$0xff]
  %v84 = vld [vmem:[%s0 + $0x148] sm:$0xff]
  %v85 = vld [vmem:[%s0 + $0x150] sm:$0xff]
  %v86 = vld [vmem:[%s0 + $0x158] sm:$0xff]
  %v87 = vld [vmem:[%s0 + $0x160] sm:$0xff]
  %v88 = vld [vmem:[%s0 + $0x168] sm:$0xff]
  %v89 = vld [vmem:[%s0 + $0x170] sm:$0xff]
  %v90 = vld [vmem:[%s0 + $0x178] sm:$0xff]
  %v91 = vld [vmem:[%s0 + $0x180] sm:$0xff]
  %v92 = vld [vmem:[%s0 + $0x188] sm:$0xff]
  %v93 = vld [vmem:[%s0 + $0x190] sm:$0xff]
  %v94 = vld [vmem:[%s0 + $0x198] sm:$0xff]
  %v95 = vld [vmem:[%s0 + $0x1a0] sm:$0xff]
  %v96 = vld [vmem:[%s0 + $0x1a8] sm:$0xff]
  %v97 = vld [vmem:[%s0 + $0x1b0] sm:$0xff]
  %v98 = vld [vmem:[%s0 + $0x1b8] sm:$0xff]
  %v99 = vld [vmem:[%s0 + $0x1c0] sm:$0xff]
  %v100 = vld [vmem:[%s0 + $0x1c8] sm:$0xff]
  %v101 = vld [vmem:[%s0 + $0x1d0] sm:$0xff]
  %v102 = vld [vmem:[%s0 + $0x1d8] sm:$0xff]
  %v103 = vld [vmem:[%s0 + $0x1e0] sm:$0xff]
  %v104 = vld [vmem:[%s0 + $0x1e8] sm:$0xff]
  %v105 = vld [vmem:[%s0 + $0x1f0] sm:$0xff]
  %v106 = vld [vmem:[%s0 + $0x1f8] sm:$0xff]
  %v107 = vld [vmem:[%s1] sm:$0xff]
  %v108 = vld [vmem:[%s1 + $0x8] sm:$0xf]
  %v109 = vld [vmem:[%s2] sm:$0x1]
  %v111 = vlaneseq
  %v112 = vshrl.u32 %v111, 7
  %v113 = vsub.s32 0, %v112
  %v114 = vrot.slane %v109, %v113
  %vm116 = vcmask 97280
  %v118 = vsel %vm116, %v43, 0
  %v121 = vsel %vm116, %v44, 0
  %v124 = vsel %vm116, %v45, 0
  %v127 = vsel %vm116, %v46, 0
  %v130 = vsel %vm116, %v47, 0
  %v133 = vsel %vm116, %v48, 0
  %v136 = vsel %vm116, %v49, 0
  %v139 = vsel %vm116, %v50, 0
  %v142 = vsel %vm116, %v51, 0
  %v145 = vsel %vm116, %v52, 0
  %v148 = vsel %vm116, %v53, 0
  %v151 = vsel %vm116, %v54, 0
  %v154 = vsel %vm116, %v55, 0
  %v157 = vsel %vm116, %v56, 0
  %v160 = vsel %vm116, %v57, 0
  %v163 = vsel %vm116, %v58, 0
  %v166 = vsel %vm116, %v59, 0
  %v169 = vsel %vm116, %v60, 0
  %v172 = vsel %vm116, %v61, 0
  %v175 = vsel %vm116, %v62, 0
  %v178 = vsel %vm116, %v63, 0
  %v181 = vsel %vm116, %v64, 0
  %v184 = vsel %vm116, %v65, 0
  %v187 = vsel %vm116, %v66, 0
  %v190 = vsel %vm116, %v67, 0
  %v193 = vsel %vm116, %v68, 0
  %v196 = vsel %vm116, %v69, 0
  %v199 = vsel %vm116, %v70, 0
  %v202 = vsel %vm116, %v71, 0
  %v205 = vsel %vm116, %v72, 0
  %v208 = vsel %vm116, %v73, 0
  %v211 = vsel %vm116, %v74, 0
  %v214 = vsel %vm116, %v75, 0
  %v217 = vsel %vm116, %v76, 0
  %v220 = vsel %vm116, %v77, 0
  %v223 = vsel %vm116, %v78, 0
  %v226 = vsel %vm116, %v79, 0
  %v229 = vsel %vm116, %v80, 0
  %v232 = vsel %vm116, %v81, 0
  %v235 = vsel %vm116, %v82, 0
  %v238 = vsel %vm116, %v83, 0
  %v241 = vsel %vm116, %v84, 0
  %v244 = vsel %vm116, %v85, 0
  %v247 = vsel %vm116, %v86, 0
  %v250 = vsel %vm116, %v87, 0
  %v253 = vsel %vm116, %v88, 0
  %v256 = vsel %vm116, %v89, 0
  %v259 = vsel %vm116, %v90, 0
  %v262 = vsel %vm116, %v91, 0
  %v265 = vsel %vm116, %v92, 0
  %v268 = vsel %vm116, %v93, 0
  %v271 = vsel %vm116, %v94, 0
  %v274 = vsel %vm116, %v95, 0
  %v277 = vsel %vm116, %v96, 0
  %v280 = vsel %vm116, %v97, 0
  %v283 = vsel %vm116, %v98, 0
  %v286 = vsel %vm116, %v99, 0
  %v289 = vsel %vm116, %v100, 0
  %v292 = vsel %vm116, %v101, 0
  %v295 = vsel %vm116, %v102, 0
  %v298 = vsel %vm116, %v103, 0
  %v301 = vsel %vm116, %v104, 0
  %v304 = vsel %vm116, %v105, 0
  %v307 = vsel %vm116, %v106, 0
  %vm309 = vcmask 1043456
  %v311 = vsel %vm309, %v108, 0
  %313 = vmatprep.subr.mxu0 0.0
  %314 = vmatpush1.msra.mxu0 0.0
  %315 = vmatprep.subr.mxu0 0.0
  %316 = vmatpush1.msra.mxu0 0.0
  %317 = vmatprep.subr.mxu0 0.0
  %318 = vmatpush1.msra.mxu0 0.0
  %319 = vmatprep.subr.mxu0 0.0
  %320 = vmatpush1.msra.mxu0 0.0
  %321 = vmatprep.subr.mxu0 0.0
  %322 = vmatpush1.msra.mxu0 0.0
  %323 = vmatprep.subr.mxu0 0.0
  %324 = vmatpush1.msra.mxu0 0.0
  %325 = vmatprep.subr.mxu0 0.0
  %326 = vmatpush1.msra.mxu0 0.0
  %327 = vmatprep.subr.mxu0 0.0
  %328 = vmatpush1.msra.mxu0 0.0
  %329 = vmatprep.subr.mxu0 0.0
  %330 = vmatpush1.msra.mxu0 0.0
  %331 = vmatprep.subr.mxu0 0.0
  %332 = vmatpush1.msra.mxu0 0.0
  %333 = vmatprep.subr.mxu0 0.0
  %334 = vmatpush1.msra.mxu0 0.0
  %335 = vmatprep.subr.mxu0 0.0
  %336 = vmatpush1.msra.mxu0 0.0
  %337 = vmatprep.subr.mxu0 0.0
  %338 = vmatpush1.msra.mxu0 0.0
  %339 = vmatprep.subr.mxu0 0.0
  %340 = vmatpush1.msra.mxu0 0.0
  %341 = vmatprep.subr.mxu0 0.0
  %342 = vmatpush1.msra.mxu0 %v311
  %343 = vmatprep.subr.mxu0 0.0
  %344 = vmatpush1.msra.mxu0 %v107
  %345 = vmatprep.subr.mxu0 0.0
  %346 = vmatpush2.msra.mxu0 0.0
  %347 = vmatprep.subr.mxu0 0.0
  %348 = vmatpush2.msra.mxu0 0.0
  %349 = vmatprep.subr.mxu0 0.0
  %350 = vmatpush2.msra.mxu0 0.0
  %351 = vmatprep.subr.mxu0 0.0
  %352 = vmatpush2.msra.mxu0 0.0
  %353 = vmatprep.subr.mxu0 0.0
  %354 = vmatpush2.msra.mxu0 0.0
  %355 = vmatprep.subr.mxu0 0.0
  %356 = vmatpush2.msra.mxu0 0.0
  %357 = vmatprep.subr.mxu0 0.0
  %358 = vmatpush2.msra.mxu0 0.0
  %359 = vmatprep.subr.mxu0 0.0
  %360 = vmatpush2.msra.mxu0 0.0
  %361 = vmatprep.subr.mxu0 0.0
  %362 = vmatpush2.msra.mxu0 0.0
  %363 = vmatprep.subr.mxu0 0.0
  %364 = vmatpush2.msra.mxu0 0.0
  %365 = vmatprep.subr.mxu0 0.0
  %366 = vmatpush2.msra.mxu0 0.0
  %367 = vmatprep.subr.mxu0 0.0
  %368 = vmatpush2.msra.mxu0 0.0
  %369 = vmatprep.subr.mxu0 0.0
  %370 = vmatpush2.msra.mxu0 0.0
  %371 = vmatprep.subr.mxu0 0.0
  %372 = vmatpush2.msra.mxu0 0.0
  %373 = vmatprep.subr.mxu0 0.0
  %374 = vmatpush2.msra.mxu0 0.0
  %375 = vmatprep.subr.mxu0 0.0
  %376 = vmatpush2.msra.mxu0 0.0
  %377 = vmatprep.mubr.f32.mxu0 0.0
  %378 = vmatmul.mubr.f32.gmra.mxu0 %v118
  %v379 = vpop.f32.mrf.mxu0
  %v380 = vadd.f32 %v114, %v379
  %v381 = vpop.f32.mrf.mxu0
  %382 = vmatprep.mubr.f32.mxu0 0.0
  %383 = vmatmul.mubr.f32.gmra.mxu0 %v121
  %v384 = vpop.f32.mrf.mxu0
  %v385 = vadd.f32 %v114, %v384
  %v386 = vpop.f32.mrf.mxu0
  %387 = vmatprep.mubr.f32.mxu0 0.0
  %388 = vmatmul.mubr.f32.gmra.mxu0 %v124
  %v389 = vpop.f32.mrf.mxu0
  %v390 = vadd.f32 %v114, %v389
  %v391 = vpop.f32.mrf.mxu0
  %392 = vmatprep.mubr.f32.mxu0 0.0
  %393 = vmatmul.mubr.f32.gmra.mxu0 %v127
  %v394 = vpop.f32.mrf.mxu0
  %v395 = vadd.f32 %v114, %v394
  %v396 = vpop.f32.mrf.mxu0
  %397 = vmatprep.mubr.f32.mxu0 0.0
  %398 = vmatmul.mubr.f32.gmra.mxu0 %v130
  %v399 = vpop.f32.mrf.mxu0
  %v400 = vadd.f32 %v114, %v399
  %v401 = vpop.f32.mrf.mxu0
  %402 = vmatprep.mubr.f32.mxu0 0.0
  %403 = vmatmul.mubr.f32.gmra.mxu0 %v133
  %v404 = vpop.f32.mrf.mxu0
  %v405 = vadd.f32 %v114, %v404
  %v406 = vpop.f32.mrf.mxu0
  %407 = vmatprep.mubr.f32.mxu0 0.0
  %408 = vmatmul.mubr.f32.gmra.mxu0 %v136
  %v409 = vpop.f32.mrf.mxu0
  %v410 = vadd.f32 %v114, %v409
  %v411 = vpop.f32.mrf.mxu0
  %412 = vmatprep.mubr.f32.mxu0 0.0
  %413 = vmatmul.mubr.f32.gmra.mxu0 %v139
  %v414 = vpop.f32.mrf.mxu0
  %v415 = vadd.f32 %v114, %v414
  %v416 = vpop.f32.mrf.mxu0
  %417 = vmatprep.mubr.f32.mxu0 0.0
  %418 = vmatmul.mubr.f32.gmra.mxu0 %v142
  %v419 = vpop.f32.mrf.mxu0
  %v420 = vadd.f32 %v114, %v419
  %v421 = vpop.f32.mrf.mxu0
  %422 = vmatprep.mubr.f32.mxu0 0.0
  %423 = vmatmul.mubr.f32.gmra.mxu0 %v145
  %v424 = vpop.f32.mrf.mxu0
  %v425 = vadd.f32 %v114, %v424
  %v426 = vpop.f32.mrf.mxu0
  %427 = vmatprep.mubr.f32.mxu0 0.0
  %428 = vmatmul.mubr.f32.gmra.mxu0 %v148
  %v429 = vpop.f32.mrf.mxu0
  %v430 = vadd.f32 %v114, %v429
  %v431 = vpop.f32.mrf.mxu0
  %432 = vmatprep.mubr.f32.mxu0 0.0
  %433 = vmatmul.mubr.f32.gmra.mxu0 %v151
  %v434 = vpop.f32.mrf.mxu0
  %v435 = vadd.f32 %v114, %v434
  %v436 = vpop.f32.mrf.mxu0
  %437 = vmatprep.mubr.f32.mxu0 0.0
  %438 = vmatmul.mubr.f32.gmra.mxu0 %v154
  %v439 = vpop.f32.mrf.mxu0
  %v440 = vadd.f32 %v114, %v439
  %v441 = vpop.f32.mrf.mxu0
  %442 = vmatprep.mubr.f32.mxu0 0.0
  %443 = vmatmul.mubr.f32.gmra.mxu0 %v157
  %v444 = vpop.f32.mrf.mxu0
  %v445 = vadd.f32 %v114, %v444
  %v446 = vpop.f32.mrf.mxu0
  %447 = vmatprep.mubr.f32.mxu0 0.0
  %448 = vmatmul.mubr.f32.gmra.mxu0 %v160
  %v449 = vpop.f32.mrf.mxu0
  %v450 = vadd.f32 %v114, %v449
  %v451 = vpop.f32.mrf.mxu0
  %452 = vmatprep.mubr.f32.mxu0 0.0
  %453 = vmatmul.mubr.f32.gmra.mxu0 %v163
  %v454 = vpop.f32.mrf.mxu0
  %v455 = vadd.f32 %v114, %v454
  %v456 = vpop.f32.mrf.mxu0
  %457 = vmatprep.mubr.f32.mxu0 0.0
  %458 = vmatmul.mubr.f32.gmra.mxu0 %v166
  %v459 = vpop.f32.mrf.mxu0
  %v460 = vadd.f32 %v114, %v459
  %v461 = vpop.f32.mrf.mxu0
  %462 = vmatprep.mubr.f32.mxu0 0.0
  %463 = vmatmul.mubr.f32.gmra.mxu0 %v169
  %v464 = vpop.f32.mrf.mxu0
  %v465 = vadd.f32 %v114, %v464
  %v466 = vpop.f32.mrf.mxu0
  %467 = vmatprep.mubr.f32.mxu0 0.0
  %468 = vmatmul.mubr.f32.gmra.mxu0 %v172
  %v469 = vpop.f32.mrf.mxu0
  %v470 = vadd.f32 %v114, %v469
  %v471 = vpop.f32.mrf.mxu0
  %472 = vmatprep.mubr.f32.mxu0 0.0
  %473 = vmatmul.mubr.f32.gmra.mxu0 %v175
  %v474 = vpop.f32.mrf.mxu0
  %v475 = vadd.f32 %v114, %v474
  %v476 = vpop.f32.mrf.mxu0
  %477 = vmatprep.mubr.f32.mxu0 0.0
  %478 = vmatmul.mubr.f32.gmra.mxu0 %v178
  %v479 = vpop.f32.mrf.mxu0
  %v480 = vadd.f32 %v114, %v479
  %v481 = vpop.f32.mrf.mxu0
  %482 = vmatprep.mubr.f32.mxu0 0.0
  %483 = vmatmul.mubr.f32.gmra.mxu0 %v181
  %v484 = vpop.f32.mrf.mxu0
  %v485 = vadd.f32 %v114, %v484
  %v486 = vpop.f32.mrf.mxu0
  %487 = vmatprep.mubr.f32.mxu0 0.0
  %488 = vmatmul.mubr.f32.gmra.mxu0 %v184
  %v489 = vpop.f32.mrf.mxu0
  %v490 = vadd.f32 %v114, %v489
  %v491 = vpop.f32.mrf.mxu0
  %492 = vmatprep.mubr.f32.mxu0 0.0
  %493 = vmatmul.mubr.f32.gmra.mxu0 %v187
  %v494 = vpop.f32.mrf.mxu0
  %v495 = vadd.f32 %v114, %v494
  %v496 = vpop.f32.mrf.mxu0
  %497 = vmatprep.mubr.f32.mxu0 0.0
  %498 = vmatmul.mubr.f32.gmra.mxu0 %v190
  %v499 = vpop.f32.mrf.mxu0
  %v500 = vadd.f32 %v114, %v499
  %v501 = vpop.f32.mrf.mxu0
  %502 = vmatprep.mubr.f32.mxu0 0.0
  %503 = vmatmul.mubr.f32.gmra.mxu0 %v193
  %v504 = vpop.f32.mrf.mxu0
  %v505 = vadd.f32 %v114, %v504
  %v506 = vpop.f32.mrf.mxu0
  %507 = vmatprep.mubr.f32.mxu0 0.0
  %508 = vmatmul.mubr.f32.gmra.mxu0 %v196
  %v509 = vpop.f32.mrf.mxu0
  %v510 = vadd.f32 %v114, %v509
  %v511 = vpop.f32.mrf.mxu0
  %512 = vmatprep.mubr.f32.mxu0 0.0
  %513 = vmatmul.mubr.f32.gmra.mxu0 %v199
  %v514 = vpop.f32.mrf.mxu0
  %v515 = vadd.f32 %v114, %v514
  %v516 = vpop.f32.mrf.mxu0
  %517 = vmatprep.mubr.f32.mxu0 0.0
  %518 = vmatmul.mubr.f32.gmra.mxu0 %v202
  %v519 = vpop.f32.mrf.mxu0
  %v520 = vadd.f32 %v114, %v519
  %v521 = vpop.f32.mrf.mxu0
  %522 = vmatprep.mubr.f32.mxu0 0.0
  %523 = vmatmul.mubr.f32.gmra.mxu0 %v205
  %v524 = vpop.f32.mrf.mxu0
  %v525 = vadd.f32 %v114, %v524
  %v526 = vpop.f32.mrf.mxu0
  %527 = vmatprep.mubr.f32.mxu0 0.0
  %528 = vmatmul.mubr.f32.gmra.mxu0 %v208
  %v529 = vpop.f32.mrf.mxu0
  %v530 = vadd.f32 %v114, %v529
  %v531 = vpop.f32.mrf.mxu0
  %532 = vmatprep.mubr.f32.mxu0 0.0
  %533 = vmatmul.mubr.f32.gmra.mxu0 %v211
  %v534 = vpop.f32.mrf.mxu0
  %v535 = vadd.f32 %v114, %v534
  %v536 = vpop.f32.mrf.mxu0
  %537 = vmatprep.mubr.f32.mxu0 0.0
  %538 = vmatmul.mubr.f32.gmra.mxu0 %v214
  %v539 = vpop.f32.mrf.mxu0
  %v540 = vadd.f32 %v114, %v539
  %v541 = vpop.f32.mrf.mxu0
  %542 = vmatprep.mubr.f32.mxu0 0.0
  %543 = vmatmul.mubr.f32.gmra.mxu0 %v217
  %v544 = vpop.f32.mrf.mxu0
  %v545 = vadd.f32 %v114, %v544
  %v546 = vpop.f32.mrf.mxu0
  %547 = vmatprep.mubr.f32.mxu0 0.0
  %548 = vmatmul.mubr.f32.gmra.mxu0 %v220
  %v549 = vpop.f32.mrf.mxu0
  %v550 = vadd.f32 %v114, %v549
  %v551 = vpop.f32.mrf.mxu0
  %552 = vmatprep.mubr.f32.mxu0 0.0
  %553 = vmatmul.mubr.f32.gmra.mxu0 %v223
  %v554 = vpop.f32.mrf.mxu0
  %v555 = vadd.f32 %v114, %v554
  %v556 = vpop.f32.mrf.mxu0
  %557 = vmatprep.mubr.f32.mxu0 0.0
  %558 = vmatmul.mubr.f32.gmra.mxu0 %v226
  %v559 = vpop.f32.mrf.mxu0
  %v560 = vadd.f32 %v114, %v559
  %v561 = vpop.f32.mrf.mxu0
  %562 = vmatprep.mubr.f32.mxu0 0.0
  %563 = vmatmul.mubr.f32.gmra.mxu0 %v229
  %v564 = vpop.f32.mrf.mxu0
  %v565 = vadd.f32 %v114, %v564
  %v566 = vpop.f32.mrf.mxu0
  %567 = vmatprep.mubr.f32.mxu0 0.0
  %568 = vmatmul.mubr.f32.gmra.mxu0 %v232
  %v569 = vpop.f32.mrf.mxu0
  %v570 = vadd.f32 %v114, %v569
  %v571 = vpop.f32.mrf.mxu0
  %572 = vmatprep.mubr.f32.mxu0 0.0
  %573 = vmatmul.mubr.f32.gmra.mxu0 %v235
  %v574 = vpop.f32.mrf.mxu0
  %v575 = vadd.f32 %v114, %v574
  %v576 = vpop.f32.mrf.mxu0
  %577 = vmatprep.mubr.f32.mxu0 0.0
  %578 = vmatmul.mubr.f32.gmra.mxu0 %v238
  %v579 = vpop.f32.mrf.mxu0
  %v580 = vadd.f32 %v114, %v579
  %v581 = vpop.f32.mrf.mxu0
  %582 = vmatprep.mubr.f32.mxu0 0.0
  %583 = vmatmul.mubr.f32.gmra.mxu0 %v241
  %v584 = vpop.f32.mrf.mxu0
  %v585 = vadd.f32 %v114, %v584
  %v586 = vpop.f32.mrf.mxu0
  %587 = vmatprep.mubr.f32.mxu0 0.0
  %588 = vmatmul.mubr.f32.gmra.mxu0 %v244
  %v589 = vpop.f32.mrf.mxu0
  %v590 = vadd.f32 %v114, %v589
  %v591 = vpop.f32.mrf.mxu0
  %592 = vmatprep.mubr.f32.mxu0 0.0
  %593 = vmatmul.mubr.f32.gmra.mxu0 %v247
  %v594 = vpop.f32.mrf.mxu0
  %v595 = vadd.f32 %v114, %v594
  %v596 = vpop.f32.mrf.mxu0
  %597 = vmatprep.mubr.f32.mxu0 0.0
  %598 = vmatmul.mubr.f32.gmra.mxu0 %v250
  %v599 = vpop.f32.mrf.mxu0
  %v600 = vadd.f32 %v114, %v599
  %v601 = vpop.f32.mrf.mxu0
  %602 = vmatprep.mubr.f32.mxu0 0.0
  %603 = vmatmul.mubr.f32.gmra.mxu0 %v253
  %v604 = vpop.f32.mrf.mxu0
  %v605 = vadd.f32 %v114, %v604
  %v606 = vpop.f32.mrf.mxu0
  %607 = vmatprep.mubr.f32.mxu0 0.0
  %608 = vmatmul.mubr.f32.gmra.mxu0 %v256
  %v609 = vpop.f32.mrf.mxu0
  %v610 = vadd.f32 %v114, %v609
  %v611 = vpop.f32.mrf.mxu0
  %612 = vmatprep.mubr.f32.mxu0 0.0
  %613 = vmatmul.mubr.f32.gmra.mxu0 %v259
  %v614 = vpop.f32.mrf.mxu0
  %v615 = vadd.f32 %v114, %v614
  %v616 = vpop.f32.mrf.mxu0
  %617 = vmatprep.mubr.f32.mxu0 0.0
  %618 = vmatmul.mubr.f32.gmra.mxu0 %v262
  %v619 = vpop.f32.mrf.mxu0
  %v620 = vadd.f32 %v114, %v619
  %v621 = vpop.f32.mrf.mxu0
  %622 = vmatprep.mubr.f32.mxu0 0.0
  %623 = vmatmul.mubr.f32.gmra.mxu0 %v265
  %v624 = vpop.f32.mrf.mxu0
  %v625 = vadd.f32 %v114, %v624
  %v626 = vpop.f32.mrf.mxu0
  %627 = vmatprep.mubr.f32.mxu0 0.0
  %628 = vmatmul.mubr.f32.gmra.mxu0 %v268
  %v629 = vpop.f32.mrf.mxu0
  %v630 = vadd.f32 %v114, %v629
  %v631 = vpop.f32.mrf.mxu0
  %632 = vmatprep.mubr.f32.mxu0 0.0
  %633 = vmatmul.mubr.f32.gmra.mxu0 %v271
  %v634 = vpop.f32.mrf.mxu0
  %v635 = vadd.f32 %v114, %v634
  %v636 = vpop.f32.mrf.mxu0
  %637 = vmatprep.mubr.f32.mxu0 0.0
  %638 = vmatmul.mubr.f32.gmra.mxu0 %v274
  %v639 = vpop.f32.mrf.mxu0
  %v640 = vadd.f32 %v114, %v639
  %v641 = vpop.f32.mrf.mxu0
  %642 = vmatprep.mubr.f32.mxu0 0.0
  %643 = vmatmul.mubr.f32.gmra.mxu0 %v277
  %v644 = vpop.f32.mrf.mxu0
  %v645 = vadd.f32 %v114, %v644
  %v646 = vpop.f32.mrf.mxu0
  %647 = vmatprep.mubr.f32.mxu0 0.0
  %648 = vmatmul.mubr.f32.gmra.mxu0 %v280
  %v649 = vpop.f32.mrf.mxu0
  %v650 = vadd.f32 %v114, %v649
  %v651 = vpop.f32.mrf.mxu0
  %652 = vmatprep.mubr.f32.mxu0 0.0
  %653 = vmatmul.mubr.f32.gmra.mxu0 %v283
  %v654 = vpop.f32.mrf.mxu0
  %v655 = vadd.f32 %v114, %v654
  %v656 = vpop.f32.mrf.mxu0
  %657 = vmatprep.mubr.f32.mxu0 0.0
  %658 = vmatmul.mubr.f32.gmra.mxu0 %v286
  %v659 = vpop.f32.mrf.mxu0
  %v660 = vadd.f32 %v114, %v659
  %v661 = vpop.f32.mrf.mxu0
  %662 = vmatprep.mubr.f32.mxu0 0.0
  %663 = vmatmul.mubr.f32.gmra.mxu0 %v289
  %v664 = vpop.f32.mrf.mxu0
  %v665 = vadd.f32 %v114, %v664
  %v666 = vpop.f32.mrf.mxu0
  %667 = vmatprep.mubr.f32.mxu0 0.0
  %668 = vmatmul.mubr.f32.gmra.mxu0 %v292
  %v669 = vpop.f32.mrf.mxu0
  %v670 = vadd.f32 %v114, %v669
  %v671 = vpop.f32.mrf.mxu0
  %672 = vmatprep.mubr.f32.mxu0 0.0
  %673 = vmatmul.mubr.f32.gmra.mxu0 %v295
  %v674 = vpop.f32.mrf.mxu0
  %v675 = vadd.f32 %v114, %v674
  %v676 = vpop.f32.mrf.mxu0
  %677 = vmatprep.mubr.f32.mxu0 0.0
  %678 = vmatmul.mubr.f32.gmra.mxu0 %v298
  %v679 = vpop.f32.mrf.mxu0
  %v680 = vadd.f32 %v114, %v679
  %v681 = vpop.f32.mrf.mxu0
  %682 = vmatprep.mubr.f32.mxu0 0.0
  %683 = vmatmul.mubr.f32.gmra.mxu0 %v301
  %v684 = vpop.f32.mrf.mxu0
  %v685 = vadd.f32 %v114, %v684
  %v686 = vpop.f32.mrf.mxu0
  %687 = vmatprep.mubr.f32.mxu0 0.0
  %688 = vmatmul.mubr.f32.gmra.mxu0 %v304
  %v689 = vpop.f32.mrf.mxu0
  %v690 = vadd.f32 %v114, %v689
  %v691 = vpop.f32.mrf.mxu0
  %692 = vmatprep.mubr.f32.mxu0 0.0
  %693 = vmatmul.mubr.f32.gmra.mxu0 %v307
  %v694 = vpop.f32.mrf.mxu0
  %v695 = vadd.f32 %v114, %v694
  %v696 = vpop.f32.mrf.mxu0
  %697 = vdwg.mxu0
  %vm698 = vcmp.gt.f32.partialorder %v380, 0.0
  %vm699 = vcmp.gt.f32.partialorder %v385, 0.0
  %vm700 = vcmp.gt.f32.partialorder %v390, 0.0
  %vm701 = vcmp.gt.f32.partialorder %v395, 0.0
  %vm702 = vcmp.gt.f32.partialorder %v400, 0.0
  %vm703 = vcmp.gt.f32.partialorder %v405, 0.0
  %vm704 = vcmp.gt.f32.partialorder %v410, 0.0
  %vm705 = vcmp.gt.f32.partialorder %v415, 0.0
  %vm706 = vcmp.gt.f32.partialorder %v420, 0.0
  %vm707 = vcmp.gt.f32.partialorder %v425, 0.0
  %vm708 = vcmp.gt.f32.partialorder %v430, 0.0
  %vm709 = vcmp.gt.f32.partialorder %v435, 0.0
  %vm710 = vcmp.gt.f32.partialorder %v440, 0.0
  %vm711 = vcmp.gt.f32.partialorder %v445, 0.0
  %vm712 = vcmp.gt.f32.partialorder %v450, 0.0
  %vm713 = vcmp.gt.f32.partialorder %v455, 0.0
  %vm714 = vcmp.gt.f32.partialorder %v460, 0.0
  %vm715 = vcmp.gt.f32.partialorder %v465, 0.0
  %vm716 = vcmp.gt.f32.partialorder %v470, 0.0
  %vm717 = vcmp.gt.f32.partialorder %v475, 0.0
  %vm718 = vcmp.gt.f32.partialorder %v480, 0.0
  %vm719 = vcmp.gt.f32.partialorder %v485, 0.0
  %vm720 = vcmp.gt.f32.partialorder %v490, 0.0
  %vm721 = vcmp.gt.f32.partialorder %v495, 0.0
  %vm722 = vcmp.gt.f32.partialorder %v500, 0.0
  %vm723 = vcmp.gt.f32.partialorder %v505, 0.0
  %vm724 = vcmp.gt.f32.partialorder %v510, 0.0
  %vm725 = vcmp.gt.f32.partialorder %v515, 0.0
  %vm726 = vcmp.gt.f32.partialorder %v520, 0.0
  %vm727 = vcmp.gt.f32.partialorder %v525, 0.0
  %vm728 = vcmp.gt.f32.partialorder %v530, 0.0
  %vm729 = vcmp.gt.f32.partialorder %v535, 0.0
  %vm730 = vcmp.gt.f32.partialorder %v540, 0.0
  %vm731 = vcmp.gt.f32.partialorder %v545, 0.0
  %vm732 = vcmp.gt.f32.partialorder %v550, 0.0
  %vm733 = vcmp.gt.f32.partialorder %v555, 0.0
  %vm734 = vcmp.gt.f32.partialorder %v560, 0.0
  %vm735 = vcmp.gt.f32.partialorder %v565, 0.0
  %vm736 = vcmp.gt.f32.partialorder %v570, 0.0
  %vm737 = vcmp.gt.f32.partialorder %v575, 0.0
  %vm738 = vcmp.gt.f32.partialorder %v580, 0.0
  %vm739 = vcmp.gt.f32.partialorder %v585, 0.0
  %vm740 = vcmp.gt.f32.partialorder %v590, 0.0
  %vm741 = vcmp.gt.f32.partialorder %v595, 0.0
  %vm742 = vcmp.gt.f32.partialorder %v600, 0.0
  %vm743 = vcmp.gt.f32.partialorder %v605, 0.0
  %vm744 = vcmp.gt.f32.partialorder %v610, 0.0
  %vm745 = vcmp.gt.f32.partialorder %v615, 0.0
  %vm746 = vcmp.gt.f32.partialorder %v620, 0.0
  %vm747 = vcmp.gt.f32.partialorder %v625, 0.0
  %vm748 = vcmp.gt.f32.partialorder %v630, 0.0
  %vm749 = vcmp.gt.f32.partialorder %v635, 0.0
  %vm750 = vcmp.gt.f32.partialorder %v640, 0.0
  %vm751 = vcmp.gt.f32.partialorder %v645, 0.0
  %vm752 = vcmp.gt.f32.partialorder %v650, 0.0
  %vm753 = vcmp.gt.f32.partialorder %v655, 0.0
  %vm754 = vcmp.gt.f32.partialorder %v660, 0.0
  %vm755 = vcmp.gt.f32.partialorder %v665, 0.0
  %vm756 = vcmp.gt.f32.partialorder %v670, 0.0
  %vm757 = vcmp.gt.f32.partialorder %v675, 0.0
  %vm758 = vcmp.gt.f32.partialorder %v680, 0.0
  %vm759 = vcmp.gt.f32.partialorder %v685, 0.0
  %vm760 = vcmp.gt.f32.partialorder %v690, 0.0
  %vm761 = vcmp.gt.f32.partialorder %v695, 0.0
  %v762 = vmul.f32 %v380, 0.2
  %v763 = vmul.f32 %v385, 0.2
  %v764 = vmul.f32 %v390, 0.2
  %v765 = vmul.f32 %v395, 0.2
  %v766 = vmul.f32 %v400, 0.2
  %v767 = vmul.f32 %v405, 0.2
  %v768 = vmul.f32 %v410, 0.2
  %v769 = vmul.f32 %v415, 0.2
  %v770 = vmul.f32 %v420, 0.2
  %v771 = vmul.f32 %v425, 0.2
  %v772 = vmul.f32 %v430, 0.2
  %v773 = vmul.f32 %v435, 0.2
  %v774 = vmul.f32 %v440, 0.2
  %v775 = vmul.f32 %v445, 0.2
  %v776 = vmul.f32 %v450, 0.2
  %v777 = vmul.f32 %v455, 0.2
  %v778 = vmul.f32 %v460, 0.2
  %v779 = vmul.f32 %v465, 0.2
  %v780 = vmul.f32 %v470, 0.2
  %v781 = vmul.f32 %v475, 0.2
  %v782 = vmul.f32 %v480, 0.2
  %v783 = vmul.f32 %v485, 0.2
  %v784 = vmul.f32 %v490, 0.2
  %v785 = vmul.f32 %v495, 0.2
  %v786 = vmul.f32 %v500, 0.2
  %v787 = vmul.f32 %v505, 0.2
  %v788 = vmul.f32 %v510, 0.2
  %v789 = vmul.f32 %v515, 0.2
  %v790 = vmul.f32 %v520, 0.2
  %v791 = vmul.f32 %v525, 0.2
  %v792 = vmul.f32 %v530, 0.2
  %v793 = vmul.f32 %v535, 0.2
  %v794 = vmul.f32 %v540, 0.2
  %v795 = vmul.f32 %v545, 0.2
  %v796 = vmul.f32 %v550, 0.2
  %v797 = vmul.f32 %v555, 0.2
  %v798 = vmul.f32 %v560, 0.2
  %v799 = vmul.f32 %v565, 0.2
  %v800 = vmul.f32 %v570, 0.2
  %v801 = vmul.f32 %v575, 0.2
  %v802 = vmul.f32 %v580, 0.2
  %v803 = vmul.f32 %v585, 0.2
  %v804 = vmul.f32 %v590, 0.2
  %v805 = vmul.f32 %v595, 0.2
  %v806 = vmul.f32 %v600, 0.2
  %v807 = vmul.f32 %v605, 0.2
  %v808 = vmul.f32 %v610, 0.2
  %v809 = vmul.f32 %v615, 0.2
  %v810 = vmul.f32 %v620, 0.2
  %v811 = vmul.f32 %v625, 0.2
  %v812 = vmul.f32 %v630, 0.2
  %v813 = vmul.f32 %v635, 0.2
  %v814 = vmul.f32 %v640, 0.2
  %v815 = vmul.f32 %v645, 0.2
  %v816 = vmul.f32 %v650, 0.2
  %v817 = vmul.f32 %v655, 0.2
  %v818 = vmul.f32 %v660, 0.2
  %v819 = vmul.f32 %v665, 0.2
  %v820 = vmul.f32 %v670, 0.2
  %v821 = vmul.f32 %v675, 0.2
  %v822 = vmul.f32 %v680, 0.2
  %v823 = vmul.f32 %v685, 0.2
  %v824 = vmul.f32 %v690, 0.2
  %v825 = vmul.f32 %v695, 0.2
  %v826 = vsel %vm698, %v380, %v762
  %v827 = vsel %vm699, %v385, %v763
  %v828 = vsel %vm700, %v390, %v764
  %v829 = vsel %vm701, %v395, %v765
  %v830 = vsel %vm702, %v400, %v766
  %v831 = vsel %vm703, %v405, %v767
  %v832 = vsel %vm704, %v410, %v768
  %v833 = vsel %vm705, %v415, %v769
  %v834 = vsel %vm706, %v420, %v770
  %v835 = vsel %vm707, %v425, %v771
  %v836 = vsel %vm708, %v430, %v772
  %v837 = vsel %vm709, %v435, %v773
  %v838 = vsel %vm710, %v440, %v774
  %v839 = vsel %vm711, %v445, %v775
  %v840 = vsel %vm712, %v450, %v776
  %v841 = vsel %vm713, %v455, %v777
  %v842 = vsel %vm714, %v460, %v778
  %v843 = vsel %vm715, %v465, %v779
  %v844 = vsel %vm716, %v470, %v780
  %v845 = vsel %vm717, %v475, %v781
  %v846 = vsel %vm718, %v480, %v782
  %v847 = vsel %vm719, %v485, %v783
  %v848 = vsel %vm720, %v490, %v784
  %v849 = vsel %vm721, %v495, %v785
  %v850 = vsel %vm722, %v500, %v786
  %v851 = vsel %vm723, %v505, %v787
  %v852 = vsel %vm724, %v510, %v788
  %v853 = vsel %vm725, %v515, %v789
  %v854 = vsel %vm726, %v520, %v790
  %v855 = vsel %vm727, %v525, %v791
  %v856 = vsel %vm728, %v530, %v792
  %v857 = vsel %vm729, %v535, %v793
  %v858 = vsel %vm730, %v540, %v794
  %v859 = vsel %vm731, %v545, %v795
  %v860 = vsel %vm732, %v550, %v796
  %v861 = vsel %vm733, %v555, %v797
  %v862 = vsel %vm734, %v560, %v798
  %v863 = vsel %vm735, %v565, %v799
  %v864 = vsel %vm736, %v570, %v800
  %v865 = vsel %vm737, %v575, %v801
  %v866 = vsel %vm738, %v580, %v802
  %v867 = vsel %vm739, %v585, %v803
  %v868 = vsel %vm740, %v590, %v804
  %v869 = vsel %vm741, %v595, %v805
  %v870 = vsel %vm742, %v600, %v806
  %v871 = vsel %vm743, %v605, %v807
  %v872 = vsel %vm744, %v610, %v808
  %v873 = vsel %vm745, %v615, %v809
  %v874 = vsel %vm746, %v620, %v810
  %v875 = vsel %vm747, %v625, %v811
  %v876 = vsel %vm748, %v630, %v812
  %v877 = vsel %vm749, %v635, %v813
  %v878 = vsel %vm750, %v640, %v814
  %v879 = vsel %vm751, %v645, %v815
  %v880 = vsel %vm752, %v650, %v816
  %v881 = vsel %vm753, %v655, %v817
  %v882 = vsel %vm754, %v660, %v818
  %v883 = vsel %vm755, %v665, %v819
  %v884 = vsel %vm756, %v670, %v820
  %v885 = vsel %vm757, %v675, %v821
  %v886 = vsel %vm758, %v680, %v822
  %v887 = vsel %vm759, %v685, %v823
  %v888 = vsel %vm760, %v690, %v824
  %v889 = vsel %vm761, %v695, %v825
  %v890 = vld [vmem:[%s3] sm:$0xff]
  %v891 = vld [vmem:[%s3 + $0x8] sm:$0xff]
  %v892 = vld [vmem:[%s3 + $0x10] sm:$0xff]
  %v893 = vld [vmem:[%s3 + $0x18] sm:$0xff]
  %v894 = vld [vmem:[%s3 + $0x20] sm:$0xff]
  %v895 = vld [vmem:[%s3 + $0x28] sm:$0xff]
  %v896 = vld [vmem:[%s3 + $0x30] sm:$0xff]
  %v897 = vld [vmem:[%s3 + $0x38] sm:$0xff]
  %v898 = vld [vmem:[%s3 + $0x40] sm:$0xff]
  %v899 = vld [vmem:[%s3 + $0x48] sm:$0xff]
  %v900 = vld [vmem:[%s3 + $0x50] sm:$0xff]
  %v901 = vld [vmem:[%s3 + $0x58] sm:$0xff]
  %v902 = vld [vmem:[%s3 + $0x60] sm:$0xff]
  %v903 = vld [vmem:[%s3 + $0x68] sm:$0xff]
  %v904 = vld [vmem:[%s3 + $0x70] sm:$0xff]
  %v905 = vld [vmem:[%s3 + $0x78] sm:$0xff]
  %s906 = scalar_lea.vmem %s3, 128
  %v907 = vld [vmem:[%s906] sm:$0xff]
  %v908 = vld [vmem:[%s906 + $0x8] sm:$0xff]
  %v909 = vld [vmem:[%s906 + $0x10] sm:$0xff]
  %v910 = vld [vmem:[%s906 + $0x18] sm:$0xff]
  %v911 = vld [vmem:[%s906 + $0x20] sm:$0xff]
  %v912 = vld [vmem:[%s906 + $0x28] sm:$0xff]
  %v913 = vld [vmem:[%s906 + $0x30] sm:$0xff]
  %v914 = vld [vmem:[%s906 + $0x38] sm:$0xff]
  %v915 = vld [vmem:[%s906 + $0x40] sm:$0xff]
  %v916 = vld [vmem:[%s906 + $0x48] sm:$0xff]
  %v917 = vld [vmem:[%s906 + $0x50] sm:$0xff]
  %v918 = vld [vmem:[%s906 + $0x58] sm:$0xff]
  %v919 = vld [vmem:[%s906 + $0x60] sm:$0xff]
  %v920 = vld [vmem:[%s906 + $0x68] sm:$0xff]
  %v921 = vld [vmem:[%s906 + $0x70] sm:$0xff]
  %v922 = vld [vmem:[%s906 + $0x78] sm:$0xff]
  %923 = vmatprep.subr.mxu0 0.0
  %924 = vmatpush1.msra.mxu0 %v922
  %925 = vmatprep.subr.mxu0 0.0
  %926 = vmatpush1.msra.mxu0 %v921
  %927 = vmatprep.subr.mxu0 0.0
  %928 = vmatpush1.msra.mxu0 %v920
  %929 = vmatprep.subr.mxu0 0.0
  %930 = vmatpush1.msra.mxu0 %v919
  %931 = vmatprep.subr.mxu0 0.0
  %932 = vmatpush1.msra.mxu0 %v918
  %933 = vmatprep.subr.mxu0 0.0
  %934 = vmatpush1.msra.mxu0 %v917
  %935 = vmatprep.subr.mxu0 0.0
  %936 = vmatpush1.msra.mxu0 %v916
  %937 = vmatprep.subr.mxu0 0.0
  %938 = vmatpush1.msra.mxu0 %v915
  %939 = vmatprep.subr.mxu0 0.0
  %940 = vmatpush1.msra.mxu0 %v914
  %941 = vmatprep.subr.mxu0 0.0
  %942 = vmatpush1.msra.mxu0 %v913
  %943 = vmatprep.subr.mxu0 0.0
  %944 = vmatpush1.msra.mxu0 %v912
  %945 = vmatprep.subr.mxu0 0.0
  %946 = vmatpush1.msra.mxu0 %v911
  %947 = vmatprep.subr.mxu0 0.0
  %948 = vmatpush1.msra.mxu0 %v910
  %949 = vmatprep.subr.mxu0 0.0
  %950 = vmatpush1.msra.mxu0 %v909
  %951 = vmatprep.subr.mxu0 0.0
  %952 = vmatpush1.msra.mxu0 %v908
  %953 = vmatprep.subr.mxu0 0.0
  %954 = vmatpush1.msra.mxu0 %v907
  %955 = vmatprep.subr.mxu0 0.0
  %956 = vmatpush2.msra.mxu0 0.0
  %957 = vmatprep.subr.mxu0 0.0
  %958 = vmatpush2.msra.mxu0 0.0
  %959 = vmatprep.subr.mxu0 0.0
  %960 = vmatpush2.msra.mxu0 0.0
  %961 = vmatprep.subr.mxu0 0.0
  %962 = vmatpush2.msra.mxu0 0.0
  %963 = vmatprep.subr.mxu0 0.0
  %964 = vmatpush2.msra.mxu0 0.0
  %965 = vmatprep.subr.mxu0 0.0
  %966 = vmatpush2.msra.mxu0 0.0
  %967 = vmatprep.subr.mxu0 0.0
  %968 = vmatpush2.msra.mxu0 0.0
  %969 = vmatprep.subr.mxu0 0.0
  %970 = vmatpush2.msra.mxu0 0.0
  %971 = vmatprep.subr.mxu0 0.0
  %972 = vmatpush2.msra.mxu0 0.0
  %973 = vmatprep.subr.mxu0 0.0
  %974 = vmatpush2.msra.mxu0 0.0
  %975 = vmatprep.subr.mxu0 0.0
  %976 = vmatpush2.msra.mxu0 0.0
  %977 = vmatprep.subr.mxu0 0.0
  %978 = vmatpush2.msra.mxu0 0.0
  %979 = vmatprep.subr.mxu0 0.0
  %980 = vmatpush2.msra.mxu0 0.0
  %981 = vmatprep.subr.mxu0 0.0
  %982 = vmatpush2.msra.mxu0 0.0
  %983 = vmatprep.subr.mxu0 0.0
  %984 = vmatpush2.msra.mxu0 0.0
  %985 = vmatprep.subr.mxu0 0.0
  %986 = vmatpush2.msra.mxu0 0.0
  %987 = vmatprep.mubr.f32.mxu0 0.0
  %988 = vmatmul.mubr.f32.gmra.mxu0 %v842
  %v989 = vpop.f32.mrf.mxu0
  %v990 = vadd.f32 0.0, %v989
  %v991 = vpop.f32.mrf.mxu0
  %992 = vmatprep.mubr.f32.mxu0 0.0
  %993 = vmatmul.mubr.f32.gmra.mxu0 %v843
  %v994 = vpop.f32.mrf.mxu0
  %v995 = vadd.f32 0.0, %v994
  %v996 = vpop.f32.mrf.mxu0
  %997 = vmatprep.mubr.f32.mxu0 0.0
  %998 = vmatmul.mubr.f32.gmra.mxu0 %v844
  %v999 = vpop.f32.mrf.mxu0
  %v1000 = vadd.f32 0.0, %v999
  %v1001 = vpop.f32.mrf.mxu0
  %1002 = vmatprep.mubr.f32.mxu0 0.0
  %1003 = vmatmul.mubr.f32.gmra.mxu0 %v845
  %v1004 = vpop.f32.mrf.mxu0
  %v1005 = vadd.f32 0.0, %v1004
  %v1006 = vpop.f32.mrf.mxu0
  %1007 = vmatprep.mubr.f32.mxu0 0.0
  %1008 = vmatmul.mubr.f32.gmra.mxu0 %v846
  %v1009 = vpop.f32.mrf.mxu0
  %v1010 = vadd.f32 0.0, %v1009
  %v1011 = vpop.f32.mrf.mxu0
  %1012 = vmatprep.mubr.f32.mxu0 0.0
  %1013 = vmatmul.mubr.f32.gmra.mxu0 %v847
  %v1014 = vpop.f32.mrf.mxu0
  %v1015 = vadd.f32 0.0, %v1014
  %v1016 = vpop.f32.mrf.mxu0
  %1017 = vmatprep.mubr.f32.mxu0 0.0
  %1018 = vmatmul.mubr.f32.gmra.mxu0 %v848
  %v1019 = vpop.f32.mrf.mxu0
  %v1020 = vadd.f32 0.0, %v1019
  %v1021 = vpop.f32.mrf.mxu0
  %1022 = vmatprep.mubr.f32.mxu0 0.0
  %1023 = vmatmul.mubr.f32.gmra.mxu0 %v849
  %v1024 = vpop.f32.mrf.mxu0
  %v1025 = vadd.f32 0.0, %v1024
  %v1026 = vpop.f32.mrf.mxu0
  %1027 = vmatprep.mubr.f32.mxu0 0.0
  %1028 = vmatmul.mubr.f32.gmra.mxu0 %v850
  %v1029 = vpop.f32.mrf.mxu0
  %v1030 = vadd.f32 0.0, %v1029
  %v1031 = vpop.f32.mrf.mxu0
  %1032 = vmatprep.mubr.f32.mxu0 0.0
  %1033 = vmatmul.mubr.f32.gmra.mxu0 %v851
  %v1034 = vpop.f32.mrf.mxu0
  %v1035 = vadd.f32 0.0, %v1034
  %v1036 = vpop.f32.mrf.mxu0
  %1037 = vmatprep.mubr.f32.mxu0 0.0
  %1038 = vmatmul.mubr.f32.gmra.mxu0 %v852
  %v1039 = vpop.f32.mrf.mxu0
  %v1040 = vadd.f32 0.0, %v1039
  %v1041 = vpop.f32.mrf.mxu0
  %1042 = vmatprep.mubr.f32.mxu0 0.0
  %1043 = vmatmul.mubr.f32.gmra.mxu0 %v853
  %v1044 = vpop.f32.mrf.mxu0
  %v1045 = vadd.f32 0.0, %v1044
  %v1046 = vpop.f32.mrf.mxu0
  %1047 = vmatprep.mubr.f32.mxu0 0.0
  %1048 = vmatmul.mubr.f32.gmra.mxu0 %v854
  %v1049 = vpop.f32.mrf.mxu0
  %v1050 = vadd.f32 0.0, %v1049
  %v1051 = vpop.f32.mrf.mxu0
  %1052 = vmatprep.mubr.f32.mxu0 0.0
  %1053 = vmatmul.mubr.f32.gmra.mxu0 %v855
  %v1054 = vpop.f32.mrf.mxu0
  %v1055 = vadd.f32 0.0, %v1054
  %v1056 = vpop.f32.mrf.mxu0
  %1057 = vmatprep.mubr.f32.mxu0 0.0
  %1058 = vmatmul.mubr.f32.gmra.mxu0 %v856
  %v1059 = vpop.f32.mrf.mxu0
  %v1060 = vadd.f32 0.0, %v1059
  %v1061 = vpop.f32.mrf.mxu0
  %1062 = vmatprep.mubr.f32.mxu0 0.0
  %1063 = vmatmul.mubr.f32.gmra.mxu0 %v857
  %v1064 = vpop.f32.mrf.mxu0
  %v1065 = vadd.f32 0.0, %v1064
  %v1066 = vpop.f32.mrf.mxu0
  %1067 = vdwg.mxu0
  %1068 = vmatprep.subr.mxu0 0.0
  %1069 = vmatpush1.msra.mxu0 %v905
  %1070 = vmatprep.subr.mxu0 0.0
  %1071 = vmatpush1.msra.mxu0 %v904
  %1072 = vmatprep.subr.mxu0 0.0
  %1073 = vmatpush1.msra.mxu0 %v903
  %1074 = vmatprep.subr.mxu0 0.0
  %1075 = vmatpush1.msra.mxu0 %v902
  %1076 = vmatprep.subr.mxu0 0.0
  %1077 = vmatpush1.msra.mxu0 %v901
  %1078 = vmatprep.subr.mxu0 0.0
  %1079 = vmatpush1.msra.mxu0 %v900
  %1080 = vmatprep.subr.mxu0 0.0
  %1081 = vmatpush1.msra.mxu0 %v899
  %1082 = vmatprep.subr.mxu0 0.0
  %1083 = vmatpush1.msra.mxu0 %v898
  %1084 = vmatprep.subr.mxu0 0.0
  %1085 = vmatpush1.msra.mxu0 %v897
  %1086 = vmatprep.subr.mxu0 0.0
  %1087 = vmatpush1.msra.mxu0 %v896
  %1088 = vmatprep.subr.mxu0 0.0
  %1089 = vmatpush1.msra.mxu0 %v895
  %1090 = vmatprep.subr.mxu0 0.0
  %1091 = vmatpush1.msra.mxu0 %v894
  %1092 = vmatprep.subr.mxu0 0.0
  %1093 = vmatpush1.msra.mxu0 %v893
  %1094 = vmatprep.subr.mxu0 0.0
  %1095 = vmatpush1.msra.mxu0 %v892
  %1096 = vmatprep.subr.mxu0 0.0
  %1097 = vmatpush1.msra.mxu0 %v891
  %1098 = vmatprep.subr.mxu0 0.0
  %1099 = vmatpush1.msra.mxu0 %v890
  %1100 = vmatprep.subr.mxu0 0.0
  %1101 = vmatpush2.msra.mxu0 0.0
  %1102 = vmatprep.subr.mxu0 0.0
  %1103 = vmatpush2.msra.mxu0 0.0
  %1104 = vmatprep.subr.mxu0 0.0
  %1105 = vmatpush2.msra.mxu0 0.0
  %1106 = vmatprep.subr.mxu0 0.0
  %1107 = vmatpush2.msra.mxu0 0.0
  %1108 = vmatprep.subr.mxu0 0.0
  %1109 = vmatpush2.msra.mxu0 0.0
  %1110 = vmatprep.subr.mxu0 0.0
  %1111 = vmatpush2.msra.mxu0 0.0
  %1112 = vmatprep.subr.mxu0 0.0
  %1113 = vmatpush2.msra.mxu0 0.0
  %1114 = vmatprep.subr.mxu0 0.0
  %1115 = vmatpush2.msra.mxu0 0.0
  %1116 = vmatprep.subr.mxu0 0.0
  %1117 = vmatpush2.msra.mxu0 0.0
  %1118 = vmatprep.subr.mxu0 0.0
  %1119 = vmatpush2.msra.mxu0 0.0
  %1120 = vmatprep.subr.mxu0 0.0
  %1121 = vmatpush2.msra.mxu0 0.0
  %1122 = vmatprep.subr.mxu0 0.0
  %1123 = vmatpush2.msra.mxu0 0.0
  %1124 = vmatprep.subr.mxu0 0.0
  %1125 = vmatpush2.msra.mxu0 0.0
  %1126 = vmatprep.subr.mxu0 0.0
  %1127 = vmatpush2.msra.mxu0 0.0
  %1128 = vmatprep.subr.mxu0 0.0
  %1129 = vmatpush2.msra.mxu0 0.0
  %1130 = vmatprep.subr.mxu0 0.0
  %1131 = vmatpush2.msra.mxu0 0.0
  %1132 = vmatprep.mubr.f32.mxu0 0.0
  %1133 = vmatmul.mubr.f32.gmra.mxu0 %v826
  %v1134 = vpop.f32.mrf.mxu0
  %v1135 = vadd.f32 %v990, %v1134
  %v1136 = vpop.f32.mrf.mxu0
  %1137 = vmatprep.mubr.f32.mxu0 0.0
  %1138 = vmatmul.mubr.f32.gmra.mxu0 %v827
  %v1139 = vpop.f32.mrf.mxu0
  %v1140 = vadd.f32 %v995, %v1139
  %v1141 = vpop.f32.mrf.mxu0
  %1142 = vmatprep.mubr.f32.mxu0 0.0
  %1143 = vmatmul.mubr.f32.gmra.mxu0 %v828
  %v1144 = vpop.f32.mrf.mxu0
  %v1145 = vadd.f32 %v1000, %v1144
  %v1146 = vpop.f32.mrf.mxu0
  %1147 = vmatprep.mubr.f32.mxu0 0.0
  %1148 = vmatmul.mubr.f32.gmra.mxu0 %v829
  %v1149 = vpop.f32.mrf.mxu0
  %v1150 = vadd.f32 %v1005, %v1149
  %v1151 = vpop.f32.mrf.mxu0
  %1152 = vmatprep.mubr.f32.mxu0 0.0
  %1153 = vmatmul.mubr.f32.gmra.mxu0 %v830
  %v1154 = vpop.f32.mrf.mxu0
  %v1155 = vadd.f32 %v1010, %v1154
  %v1156 = vpop.f32.mrf.mxu0
  %1157 = vmatprep.mubr.f32.mxu0 0.0
  %1158 = vmatmul.mubr.f32.gmra.mxu0 %v831
  %v1159 = vpop.f32.mrf.mxu0
  %v1160 = vadd.f32 %v1015, %v1159
  %v1161 = vpop.f32.mrf.mxu0
  %1162 = vmatprep.mubr.f32.mxu0 0.0
  %1163 = vmatmul.mubr.f32.gmra.mxu0 %v832
  %v1164 = vpop.f32.mrf.mxu0
  %v1165 = vadd.f32 %v1020, %v1164
  %v1166 = vpop.f32.mrf.mxu0
  %1167 = vmatprep.mubr.f32.mxu0 0.0
  %1168 = vmatmul.mubr.f32.gmra.mxu0 %v833
  %v1169 = vpop.f32.mrf.mxu0
  %v1170 = vadd.f32 %v1025, %v1169
  %v1171 = vpop.f32.mrf.mxu0
  %1172 = vmatprep.mubr.f32.mxu0 0.0
  %1173 = vmatmul.mubr.f32.gmra.mxu0 %v834
  %v1174 = vpop.f32.mrf.mxu0
  %v1175 = vadd.f32 %v1030, %v1174
  %v1176 = vpop.f32.mrf.mxu0
  %1177 = vmatprep.mubr.f32.mxu0 0.0
  %1178 = vmatmul.mubr.f32.gmra.mxu0 %v835
  %v1179 = vpop.f32.mrf.mxu0
  %v1180 = vadd.f32 %v1035, %v1179
  %v1181 = vpop.f32.mrf.mxu0
  %1182 = vmatprep.mubr.f32.mxu0 0.0
  %1183 = vmatmul.mubr.f32.gmra.mxu0 %v836
  %v1184 = vpop.f32.mrf.mxu0
  %v1185 = vadd.f32 %v1040, %v1184
  %v1186 = vpop.f32.mrf.mxu0
  %1187 = vmatprep.mubr.f32.mxu0 0.0
  %1188 = vmatmul.mubr.f32.gmra.mxu0 %v837
  %v1189 = vpop.f32.mrf.mxu0
  %v1190 = vadd.f32 %v1045, %v1189
  %v1191 = vpop.f32.mrf.mxu0
  %1192 = vmatprep.mubr.f32.mxu0 0.0
  %1193 = vmatmul.mubr.f32.gmra.mxu0 %v838
  %v1194 = vpop.f32.mrf.mxu0
  %v1195 = vadd.f32 %v1050, %v1194
  %v1196 = vpop.f32.mrf.mxu0
  %1197 = vmatprep.mubr.f32.mxu0 0.0
  %1198 = vmatmul.mubr.f32.gmra.mxu0 %v839
  %v1199 = vpop.f32.mrf.mxu0
  %v1200 = vadd.f32 %v1055, %v1199
  %v1201 = vpop.f32.mrf.mxu0
  %1202 = vmatprep.mubr.f32.mxu0 0.0
  %1203 = vmatmul.mubr.f32.gmra.mxu0 %v840
  %v1204 = vpop.f32.mrf.mxu0
  %v1205 = vadd.f32 %v1060, %v1204
  %v1206 = vpop.f32.mrf.mxu0
  %1207 = vmatprep.mubr.f32.mxu0 0.0
  %1208 = vmatmul.mubr.f32.gmra.mxu0 %v841
  %v1209 = vpop.f32.mrf.mxu0
  %v1210 = vadd.f32 %v1065, %v1209
  %v1211 = vpop.f32.mrf.mxu0
  %1212 = vdwg.mxu0
  %s1213 = scalar_lea.vmem %s3, 256
  %v1214 = vld [vmem:[%s1213] sm:$0xff]
  %v1215 = vld [vmem:[%s1213 + $0x8] sm:$0xff]
  %v1216 = vld [vmem:[%s1213 + $0x10] sm:$0xff]
  %v1217 = vld [vmem:[%s1213 + $0x18] sm:$0xff]
  %v1218 = vld [vmem:[%s1213 + $0x20] sm:$0xff]
  %v1219 = vld [vmem:[%s1213 + $0x28] sm:$0xff]
  %v1220 = vld [vmem:[%s1213 + $0x30] sm:$0xff]
  %v1221 = vld [vmem:[%s1213 + $0x38] sm:$0xff]
  %v1222 = vld [vmem:[%s1213 + $0x40] sm:$0xff]
  %v1223 = vld [vmem:[%s1213 + $0x48] sm:$0xff]
  %v1224 = vld [vmem:[%s1213 + $0x50] sm:$0xff]
  %v1225 = vld [vmem:[%s1213 + $0x58] sm:$0xff]
  %v1226 = vld [vmem:[%s1213 + $0x60] sm:$0xff]
  %v1227 = vld [vmem:[%s1213 + $0x68] sm:$0xff]
  %v1228 = vld [vmem:[%s1213 + $0x70] sm:$0xff]
  %v1229 = vld [vmem:[%s1213 + $0x78] sm:$0xff]
  %1230 = vmatprep.subr.mxu0 0.0
  %1231 = vmatpush1.msra.mxu0 %v1229
  %1232 = vmatprep.subr.mxu0 0.0
  %1233 = vmatpush1.msra.mxu0 %v1228
  %1234 = vmatprep.subr.mxu0 0.0
  %1235 = vmatpush1.msra.mxu0 %v1227
  %1236 = vmatprep.subr.mxu0 0.0
  %1237 = vmatpush1.msra.mxu0 %v1226
  %1238 = vmatprep.subr.mxu0 0.0
  %1239 = vmatpush1.msra.mxu0 %v1225
  %1240 = vmatprep.subr.mxu0 0.0
  %1241 = vmatpush1.msra.mxu0 %v1224
  %1242 = vmatprep.subr.mxu0 0.0
  %1243 = vmatpush1.msra.mxu0 %v1223
  %1244 = vmatprep.subr.mxu0 0.0
  %1245 = vmatpush1.msra.mxu0 %v1222
  %1246 = vmatprep.subr.mxu0 0.0
  %1247 = vmatpush1.msra.mxu0 %v1221
  %1248 = vmatprep.subr.mxu0 0.0
  %1249 = vmatpush1.msra.mxu0 %v1220
  %1250 = vmatprep.subr.mxu0 0.0
  %1251 = vmatpush1.msra.mxu0 %v1219
  %1252 = vmatprep.subr.mxu0 0.0
  %1253 = vmatpush1.msra.mxu0 %v1218
  %1254 = vmatprep.subr.mxu0 0.0
  %1255 = vmatpush1.msra.mxu0 %v1217
  %1256 = vmatprep.subr.mxu0 0.0
  %1257 = vmatpush1.msra.mxu0 %v1216
  %1258 = vmatprep.subr.mxu0 0.0
  %1259 = vmatpush1.msra.mxu0 %v1215
  %1260 = vmatprep.subr.mxu0 0.0
  %1261 = vmatpush1.msra.mxu0 %v1214
  %1262 = vmatprep.subr.mxu0 0.0
  %1263 = vmatpush2.msra.mxu0 0.0
  %1264 = vmatprep.subr.mxu0 0.0
  %1265 = vmatpush2.msra.mxu0 0.0
  %1266 = vmatprep.subr.mxu0 0.0
  %1267 = vmatpush2.msra.mxu0 0.0
  %1268 = vmatprep.subr.mxu0 0.0
  %1269 = vmatpush2.msra.mxu0 0.0
  %1270 = vmatprep.subr.mxu0 0.0
  %1271 = vmatpush2.msra.mxu0 0.0
  %1272 = vmatprep.subr.mxu0 0.0
  %1273 = vmatpush2.msra.mxu0 0.0
  %1274 = vmatprep.subr.mxu0 0.0
  %1275 = vmatpush2.msra.mxu0 0.0
  %1276 = vmatprep.subr.mxu0 0.0
  %1277 = vmatpush2.msra.mxu0 0.0
  %1278 = vmatprep.subr.mxu0 0.0
  %1279 = vmatpush2.msra.mxu0 0.0
  %1280 = vmatprep.subr.mxu0 0.0
  %1281 = vmatpush2.msra.mxu0 0.0
  %1282 = vmatprep.subr.mxu0 0.0
  %1283 = vmatpush2.msra.mxu0 0.0
  %1284 = vmatprep.subr.mxu0 0.0
  %1285 = vmatpush2.msra.mxu0 0.0
  %1286 = vmatprep.subr.mxu0 0.0
  %1287 = vmatpush2.msra.mxu0 0.0
  %1288 = vmatprep.subr.mxu0 0.0
  %1289 = vmatpush2.msra.mxu0 0.0
  %1290 = vmatprep.subr.mxu0 0.0
  %1291 = vmatpush2.msra.mxu0 0.0
  %1292 = vmatprep.subr.mxu0 0.0
  %1293 = vmatpush2.msra.mxu0 0.0
  %1294 = vmatprep.mubr.f32.mxu0 0.0
  %1295 = vmatmul.mubr.f32.gmra.mxu0 %v858
  %v1296 = vpop.f32.mrf.mxu0
  %v1297 = vadd.f32 0.0, %v1296
  %v1298 = vpop.f32.mrf.mxu0
  %1299 = vmatprep.mubr.f32.mxu0 0.0
  %1300 = vmatmul.mubr.f32.gmra.mxu0 %v859
  %v1301 = vpop.f32.mrf.mxu0
  %v1302 = vadd.f32 0.0, %v1301
  %v1303 = vpop.f32.mrf.mxu0
  %1304 = vmatprep.mubr.f32.mxu0 0.0
  %1305 = vmatmul.mubr.f32.gmra.mxu0 %v860
  %v1306 = vpop.f32.mrf.mxu0
  %v1307 = vadd.f32 0.0, %v1306
  %v1308 = vpop.f32.mrf.mxu0
  %1309 = vmatprep.mubr.f32.mxu0 0.0
  %1310 = vmatmul.mubr.f32.gmra.mxu0 %v861
  %v1311 = vpop.f32.mrf.mxu0
  %v1312 = vadd.f32 0.0, %v1311
  %v1313 = vpop.f32.mrf.mxu0
  %1314 = vmatprep.mubr.f32.mxu0 0.0
  %1315 = vmatmul.mubr.f32.gmra.mxu0 %v862
  %v1316 = vpop.f32.mrf.mxu0
  %v1317 = vadd.f32 0.0, %v1316
  %v1318 = vpop.f32.mrf.mxu0
  %1319 = vmatprep.mubr.f32.mxu0 0.0
  %1320 = vmatmul.mubr.f32.gmra.mxu0 %v863
  %v1321 = vpop.f32.mrf.mxu0
  %v1322 = vadd.f32 0.0, %v1321
  %v1323 = vpop.f32.mrf.mxu0
  %1324 = vmatprep.mubr.f32.mxu0 0.0
  %1325 = vmatmul.mubr.f32.gmra.mxu0 %v864
  %v1326 = vpop.f32.mrf.mxu0
  %v1327 = vadd.f32 0.0, %v1326
  %v1328 = vpop.f32.mrf.mxu0
  %1329 = vmatprep.mubr.f32.mxu0 0.0
  %1330 = vmatmul.mubr.f32.gmra.mxu0 %v865
  %v1331 = vpop.f32.mrf.mxu0
  %v1332 = vadd.f32 0.0, %v1331
  %v1333 = vpop.f32.mrf.mxu0
  %1334 = vmatprep.mubr.f32.mxu0 0.0
  %1335 = vmatmul.mubr.f32.gmra.mxu0 %v866
  %v1336 = vpop.f32.mrf.mxu0
  %v1337 = vadd.f32 0.0, %v1336
  %v1338 = vpop.f32.mrf.mxu0
  %1339 = vmatprep.mubr.f32.mxu0 0.0
  %1340 = vmatmul.mubr.f32.gmra.mxu0 %v867
  %v1341 = vpop.f32.mrf.mxu0
  %v1342 = vadd.f32 0.0, %v1341
  %v1343 = vpop.f32.mrf.mxu0
  %1344 = vmatprep.mubr.f32.mxu0 0.0
  %1345 = vmatmul.mubr.f32.gmra.mxu0 %v868
  %v1346 = vpop.f32.mrf.mxu0
  %v1347 = vadd.f32 0.0, %v1346
  %v1348 = vpop.f32.mrf.mxu0
  %1349 = vmatprep.mubr.f32.mxu0 0.0
  %1350 = vmatmul.mubr.f32.gmra.mxu0 %v869
  %v1351 = vpop.f32.mrf.mxu0
  %v1352 = vadd.f32 0.0, %v1351
  %v1353 = vpop.f32.mrf.mxu0
  %1354 = vmatprep.mubr.f32.mxu0 0.0
  %1355 = vmatmul.mubr.f32.gmra.mxu0 %v870
  %v1356 = vpop.f32.mrf.mxu0
  %v1357 = vadd.f32 0.0, %v1356
  %v1358 = vpop.f32.mrf.mxu0
  %1359 = vmatprep.mubr.f32.mxu0 0.0
  %1360 = vmatmul.mubr.f32.gmra.mxu0 %v871
  %v1361 = vpop.f32.mrf.mxu0
  %v1362 = vadd.f32 0.0, %v1361
  %v1363 = vpop.f32.mrf.mxu0
  %1364 = vmatprep.mubr.f32.mxu0 0.0
  %1365 = vmatmul.mubr.f32.gmra.mxu0 %v872
  %v1366 = vpop.f32.mrf.mxu0
  %v1367 = vadd.f32 0.0, %v1366
  %v1368 = vpop.f32.mrf.mxu0
  %1369 = vmatprep.mubr.f32.mxu0 0.0
  %1370 = vmatmul.mubr.f32.gmra.mxu0 %v873
  %v1371 = vpop.f32.mrf.mxu0
  %v1372 = vadd.f32 0.0, %v1371
  %v1373 = vpop.f32.mrf.mxu0
  %1374 = vdwg.mxu0
  %v1375 = vadd.f32 %v1135, %v1297
  %v1376 = vadd.f32 %v1140, %v1302
  %v1377 = vadd.f32 %v1145, %v1307
  %v1378 = vadd.f32 %v1150, %v1312
  %v1379 = vadd.f32 %v1155, %v1317
  %v1380 = vadd.f32 %v1160, %v1322
  %v1381 = vadd.f32 %v1165, %v1327
  %v1382 = vadd.f32 %v1170, %v1332
  %v1383 = vadd.f32 %v1175, %v1337
  %v1384 = vadd.f32 %v1180, %v1342
  %v1385 = vadd.f32 %v1185, %v1347
  %v1386 = vadd.f32 %v1190, %v1352
  %v1387 = vadd.f32 %v1195, %v1357
  %v1388 = vadd.f32 %v1200, %v1362
  %v1389 = vadd.f32 %v1205, %v1367
  %v1390 = vadd.f32 %v1210, %v1372
  %s1391 = scalar_lea.vmem %s3, 384
  %v1392 = vld [vmem:[%s1391] sm:$0xff]
  %v1393 = vld [vmem:[%s1391 + $0x8] sm:$0xff]
  %v1394 = vld [vmem:[%s1391 + $0x10] sm:$0xff]
  %v1395 = vld [vmem:[%s1391 + $0x18] sm:$0xff]
  %v1396 = vld [vmem:[%s1391 + $0x20] sm:$0xff]
  %v1397 = vld [vmem:[%s1391 + $0x28] sm:$0xff]
  %v1398 = vld [vmem:[%s1391 + $0x30] sm:$0xff]
  %v1399 = vld [vmem:[%s1391 + $0x38] sm:$0xff]
  %v1400 = vld [vmem:[%s1391 + $0x40] sm:$0xff]
  %v1401 = vld [vmem:[%s1391 + $0x48] sm:$0xff]
  %v1402 = vld [vmem:[%s1391 + $0x50] sm:$0xff]
  %v1403 = vld [vmem:[%s1391 + $0x58] sm:$0xff]
  %v1404 = vld [vmem:[%s1391 + $0x60] sm:$0xff]
  %v1405 = vld [vmem:[%s1391 + $0x68] sm:$0xff]
  %v1406 = vld [vmem:[%s1391 + $0x70] sm:$0xff]
  %v1407 = vld [vmem:[%s1391 + $0x78] sm:$0xff]
  %1408 = vmatprep.subr.mxu0 0.0
  %1409 = vmatpush1.msra.mxu0 %v1407
  %1410 = vmatprep.subr.mxu0 0.0
  %1411 = vmatpush1.msra.mxu0 %v1406
  %1412 = vmatprep.subr.mxu0 0.0
  %1413 = vmatpush1.msra.mxu0 %v1405
  %1414 = vmatprep.subr.mxu0 0.0
  %1415 = vmatpush1.msra.mxu0 %v1404
  %1416 = vmatprep.subr.mxu0 0.0
  %1417 = vmatpush1.msra.mxu0 %v1403
  %1418 = vmatprep.subr.mxu0 0.0
  %1419 = vmatpush1.msra.mxu0 %v1402
  %1420 = vmatprep.subr.mxu0 0.0
  %1421 = vmatpush1.msra.mxu0 %v1401
  %1422 = vmatprep.subr.mxu0 0.0
  %1423 = vmatpush1.msra.mxu0 %v1400
  %1424 = vmatprep.subr.mxu0 0.0
  %1425 = vmatpush1.msra.mxu0 %v1399
  %1426 = vmatprep.subr.mxu0 0.0
  %1427 = vmatpush1.msra.mxu0 %v1398
  %1428 = vmatprep.subr.mxu0 0.0
  %1429 = vmatpush1.msra.mxu0 %v1397
  %1430 = vmatprep.subr.mxu0 0.0
  %1431 = vmatpush1.msra.mxu0 %v1396
  %1432 = vmatprep.subr.mxu0 0.0
  %1433 = vmatpush1.msra.mxu0 %v1395
  %1434 = vmatprep.subr.mxu0 0.0
  %1435 = vmatpush1.msra.mxu0 %v1394
  %1436 = vmatprep.subr.mxu0 0.0
  %1437 = vmatpush1.msra.mxu0 %v1393
  %1438 = vmatprep.subr.mxu0 0.0
  %1439 = vmatpush1.msra.mxu0 %v1392
  %1440 = vmatprep.subr.mxu0 0.0
  %1441 = vmatpush2.msra.mxu0 0.0
  %1442 = vmatprep.subr.mxu0 0.0
  %1443 = vmatpush2.msra.mxu0 0.0
  %1444 = vmatprep.subr.mxu0 0.0
  %1445 = vmatpush2.msra.mxu0 0.0
  %1446 = vmatprep.subr.mxu0 0.0
  %1447 = vmatpush2.msra.mxu0 0.0
  %1448 = vmatprep.subr.mxu0 0.0
  %1449 = vmatpush2.msra.mxu0 0.0
  %1450 = vmatprep.subr.mxu0 0.0
  %1451 = vmatpush2.msra.mxu0 0.0
  %1452 = vmatprep.subr.mxu0 0.0
  %1453 = vmatpush2.msra.mxu0 0.0
  %1454 = vmatprep.subr.mxu0 0.0
  %1455 = vmatpush2.msra.mxu0 0.0
  %1456 = vmatprep.subr.mxu0 0.0
  %1457 = vmatpush2.msra.mxu0 0.0
  %1458 = vmatprep.subr.mxu0 0.0
  %1459 = vmatpush2.msra.mxu0 0.0
  %1460 = vmatprep.subr.mxu0 0.0
  %1461 = vmatpush2.msra.mxu0 0.0
  %1462 = vmatprep.subr.mxu0 0.0
  %1463 = vmatpush2.msra.mxu0 0.0
  %1464 = vmatprep.subr.mxu0 0.0
  %1465 = vmatpush2.msra.mxu0 0.0
  %1466 = vmatprep.subr.mxu0 0.0
  %1467 = vmatpush2.msra.mxu0 0.0
  %1468 = vmatprep.subr.mxu0 0.0
  %1469 = vmatpush2.msra.mxu0 0.0
  %1470 = vmatprep.subr.mxu0 0.0
  %1471 = vmatpush2.msra.mxu0 0.0
  %1472 = vmatprep.mubr.f32.mxu0 0.0
  %1473 = vmatmul.mubr.f32.gmra.mxu0 %v874
  %v1474 = vpop.f32.mrf.mxu0
  %v1475 = vadd.f32 0.0, %v1474
  %v1476 = vpop.f32.mrf.mxu0
  %1477 = vmatprep.mubr.f32.mxu0 0.0
  %1478 = vmatmul.mubr.f32.gmra.mxu0 %v875
  %v1479 = vpop.f32.mrf.mxu0
  %v1480 = vadd.f32 0.0, %v1479
  %v1481 = vpop.f32.mrf.mxu0
  %1482 = vmatprep.mubr.f32.mxu0 0.0
  %1483 = vmatmul.mubr.f32.gmra.mxu0 %v876
  %v1484 = vpop.f32.mrf.mxu0
  %v1485 = vadd.f32 0.0, %v1484
  %v1486 = vpop.f32.mrf.mxu0
  %1487 = vmatprep.mubr.f32.mxu0 0.0
  %1488 = vmatmul.mubr.f32.gmra.mxu0 %v877
  %v1489 = vpop.f32.mrf.mxu0
  %v1490 = vadd.f32 0.0, %v1489
  %v1491 = vpop.f32.mrf.mxu0
  %1492 = vmatprep.mubr.f32.mxu0 0.0
  %1493 = vmatmul.mubr.f32.gmra.mxu0 %v878
  %v1494 = vpop.f32.mrf.mxu0
  %v1495 = vadd.f32 0.0, %v1494
  %v1496 = vpop.f32.mrf.mxu0
  %1497 = vmatprep.mubr.f32.mxu0 0.0
  %1498 = vmatmul.mubr.f32.gmra.mxu0 %v879
  %v1499 = vpop.f32.mrf.mxu0
  %v1500 = vadd.f32 0.0, %v1499
  %v1501 = vpop.f32.mrf.mxu0
  %1502 = vmatprep.mubr.f32.mxu0 0.0
  %1503 = vmatmul.mubr.f32.gmra.mxu0 %v880
  %v1504 = vpop.f32.mrf.mxu0
  %v1505 = vadd.f32 0.0, %v1504
  %v1506 = vpop.f32.mrf.mxu0
  %1507 = vmatprep.mubr.f32.mxu0 0.0
  %1508 = vmatmul.mubr.f32.gmra.mxu0 %v881
  %v1509 = vpop.f32.mrf.mxu0
  %v1510 = vadd.f32 0.0, %v1509
  %v1511 = vpop.f32.mrf.mxu0
  %1512 = vmatprep.mubr.f32.mxu0 0.0
  %1513 = vmatmul.mubr.f32.gmra.mxu0 %v882
  %v1514 = vpop.f32.mrf.mxu0
  %v1515 = vadd.f32 0.0, %v1514
  %v1516 = vpop.f32.mrf.mxu0
  %1517 = vmatprep.mubr.f32.mxu0 0.0
  %1518 = vmatmul.mubr.f32.gmra.mxu0 %v883
  %v1519 = vpop.f32.mrf.mxu0
  %v1520 = vadd.f32 0.0, %v1519
  %v1521 = vpop.f32.mrf.mxu0
  %1522 = vmatprep.mubr.f32.mxu0 0.0
  %1523 = vmatmul.mubr.f32.gmra.mxu0 %v884
  %v1524 = vpop.f32.mrf.mxu0
  %v1525 = vadd.f32 0.0, %v1524
  %v1526 = vpop.f32.mrf.mxu0
  %1527 = vmatprep.mubr.f32.mxu0 0.0
  %1528 = vmatmul.mubr.f32.gmra.mxu0 %v885
  %v1529 = vpop.f32.mrf.mxu0
  %v1530 = vadd.f32 0.0, %v1529
  %v1531 = vpop.f32.mrf.mxu0
  %1532 = vmatprep.mubr.f32.mxu0 0.0
  %1533 = vmatmul.mubr.f32.gmra.mxu0 %v886
  %v1534 = vpop.f32.mrf.mxu0
  %v1535 = vadd.f32 0.0, %v1534
  %v1536 = vpop.f32.mrf.mxu0
  %1537 = vmatprep.mubr.f32.mxu0 0.0
  %1538 = vmatmul.mubr.f32.gmra.mxu0 %v887
  %v1539 = vpop.f32.mrf.mxu0
  %v1540 = vadd.f32 0.0, %v1539
  %v1541 = vpop.f32.mrf.mxu0
  %1542 = vmatprep.mubr.f32.mxu0 0.0
  %1543 = vmatmul.mubr.f32.gmra.mxu0 %v888
  %v1544 = vpop.f32.mrf.mxu0
  %v1545 = vadd.f32 0.0, %v1544
  %v1546 = vpop.f32.mrf.mxu0
  %1547 = vmatprep.mubr.f32.mxu0 0.0
  %1548 = vmatmul.mubr.f32.gmra.mxu0 %v889
  %v1549 = vpop.f32.mrf.mxu0
  %v1550 = vadd.f32 0.0, %v1549
  %v1551 = vpop.f32.mrf.mxu0
  %1552 = vdwg.mxu0
  %v1553 = vadd.f32 %v1375, %v1475
  %v1554 = vadd.f32 %v1376, %v1480
  %v1555 = vadd.f32 %v1377, %v1485
  %v1556 = vadd.f32 %v1378, %v1490
  %v1557 = vadd.f32 %v1379, %v1495
  %v1558 = vadd.f32 %v1380, %v1500
  %v1559 = vadd.f32 %v1381, %v1505
  %v1560 = vadd.f32 %v1382, %v1510
  %v1561 = vadd.f32 %v1383, %v1515
  %v1562 = vadd.f32 %v1384, %v1520
  %v1563 = vadd.f32 %v1385, %v1525
  %v1564 = vadd.f32 %v1386, %v1530
  %v1565 = vadd.f32 %v1387, %v1535
  %v1566 = vadd.f32 %v1388, %v1540
  %v1567 = vadd.f32 %v1389, %v1545
  %v1568 = vadd.f32 %v1390, %v1550
  %v1569 = vld [vmem:[%s4] sm:$0x1]
  %v1571 = vlaneseq
  %v1572 = vshrl.u32 %v1571, 7
  %v1573 = vsub.s32 0, %v1572
  %v1574 = vrot.slane %v1569, %v1573
  %v1576 = vadd.f32 %v1553, %v1574
  %v1577 = vadd.f32 %v1554, %v1574
  %v1578 = vadd.f32 %v1555, %v1574
  %v1579 = vadd.f32 %v1556, %v1574
  %v1580 = vadd.f32 %v1557, %v1574
  %v1581 = vadd.f32 %v1558, %v1574
  %v1582 = vadd.f32 %v1559, %v1574
  %v1583 = vadd.f32 %v1560, %v1574
  %v1584 = vadd.f32 %v1561, %v1574
  %v1585 = vadd.f32 %v1562, %v1574
  %v1586 = vadd.f32 %v1563, %v1574
  %v1587 = vadd.f32 %v1564, %v1574
  %v1588 = vadd.f32 %v1565, %v1574
  %v1589 = vadd.f32 %v1566, %v1574
  %v1590 = vadd.f32 %v1567, %v1574
  %v1591 = vadd.f32 %v1568, %v1574
  %vm1592 = vcmp.gt.f32.partialorder %v1576, 0.0
  %vm1593 = vcmp.gt.f32.partialorder %v1577, 0.0
  %vm1594 = vcmp.gt.f32.partialorder %v1578, 0.0
  %vm1595 = vcmp.gt.f32.partialorder %v1579, 0.0
  %vm1596 = vcmp.gt.f32.partialorder %v1580, 0.0
  %vm1597 = vcmp.gt.f32.partialorder %v1581, 0.0
  %vm1598 = vcmp.gt.f32.partialorder %v1582, 0.0
  %vm1599 = vcmp.gt.f32.partialorder %v1583, 0.0
  %vm1600 = vcmp.gt.f32.partialorder %v1584, 0.0
  %vm1601 = vcmp.gt.f32.partialorder %v1585, 0.0
  %vm1602 = vcmp.gt.f32.partialorder %v1586, 0.0
  %vm1603 = vcmp.gt.f32.partialorder %v1587, 0.0
  %vm1604 = vcmp.gt.f32.partialorder %v1588, 0.0
  %vm1605 = vcmp.gt.f32.partialorder %v1589, 0.0
  %vm1606 = vcmp.gt.f32.partialorder %v1590, 0.0
  %vm1607 = vcmp.gt.f32.partialorder %v1591, 0.0
  %v1608 = vmul.f32 %v1576, 0.2
  %v1609 = vmul.f32 %v1577, 0.2
  %v1610 = vmul.f32 %v1578, 0.2
  %v1611 = vmul.f32 %v1579, 0.2
  %v1612 = vmul.f32 %v1580, 0.2
  %v1613 = vmul.f32 %v1581, 0.2
  %v1614 = vmul.f32 %v1582, 0.2
  %v1615 = vmul.f32 %v1583, 0.2
  %v1616 = vmul.f32 %v1584, 0.2
  %v1617 = vmul.f32 %v1585, 0.2
  %v1618 = vmul.f32 %v1586, 0.2
  %v1619 = vmul.f32 %v1587, 0.2
  %v1620 = vmul.f32 %v1588, 0.2
  %v1621 = vmul.f32 %v1589, 0.2
  %v1622 = vmul.f32 %v1590, 0.2
  %v1623 = vmul.f32 %v1591, 0.2
  %v1624 = vsel %vm1592, %v1576, %v1608
  %v1625 = vsel %vm1593, %v1577, %v1609
  %v1626 = vsel %vm1594, %v1578, %v1610
  %v1627 = vsel %vm1595, %v1579, %v1611
  %v1628 = vsel %vm1596, %v1580, %v1612
  %v1629 = vsel %vm1597, %v1581, %v1613
  %v1630 = vsel %vm1598, %v1582, %v1614
  %v1631 = vsel %vm1599, %v1583, %v1615
  %v1632 = vsel %vm1600, %v1584, %v1616
  %v1633 = vsel %vm1601, %v1585, %v1617
  %v1634 = vsel %vm1602, %v1586, %v1618
  %v1635 = vsel %vm1603, %v1587, %v1619
  %v1636 = vsel %vm1604, %v1588, %v1620
  %v1637 = vsel %vm1605, %v1589, %v1621
  %v1638 = vsel %vm1606, %v1590, %v1622
  %v1639 = vsel %vm1607, %v1591, %v1623
  %v1640 = vld [vmem:[%s5] sm:$0xff]
  %v1641 = vld [vmem:[%s5 + $0x8] sm:$0xff]
  %v1642 = vld [vmem:[%s5 + $0x10] sm:$0xff]
  %v1643 = vld [vmem:[%s5 + $0x18] sm:$0xff]
  %v1644 = vld [vmem:[%s5 + $0x20] sm:$0xff]
  %v1645 = vld [vmem:[%s5 + $0x28] sm:$0xff]
  %v1646 = vld [vmem:[%s5 + $0x30] sm:$0xff]
  %v1647 = vld [vmem:[%s5 + $0x38] sm:$0xff]
  %v1648 = vld [vmem:[%s5 + $0x40] sm:$0xff]
  %v1649 = vld [vmem:[%s5 + $0x48] sm:$0xff]
  %v1650 = vld [vmem:[%s5 + $0x50] sm:$0xff]
  %v1651 = vld [vmem:[%s5 + $0x58] sm:$0xff]
  %v1652 = vld [vmem:[%s5 + $0x60] sm:$0xff]
  %v1653 = vld [vmem:[%s5 + $0x68] sm:$0xff]
  %v1654 = vld [vmem:[%s5 + $0x70] sm:$0xff]
  %v1655 = vld [vmem:[%s5 + $0x78] sm:$0xff]
  %s1656 = scalar_lea.vmem %s5, 128
  %v1657 = vld [vmem:[%s1656] sm:$0xff]
  %v1658 = vld [vmem:[%s1656 + $0x8] sm:$0xff]
  %v1659 = vld [vmem:[%s1656 + $0x10] sm:$0xff]
  %v1660 = vld [vmem:[%s1656 + $0x18] sm:$0xff]
  %v1661 = vld [vmem:[%s1656 + $0x20] sm:$0xff]
  %v1662 = vld [vmem:[%s1656 + $0x28] sm:$0xff]
  %v1663 = vld [vmem:[%s1656 + $0x30] sm:$0xff]
  %v1664 = vld [vmem:[%s1656 + $0x38] sm:$0xff]
  %v1665 = vld [vmem:[%s1656 + $0x40] sm:$0xff]
  %v1666 = vld [vmem:[%s1656 + $0x48] sm:$0xff]
  %v1667 = vld [vmem:[%s1656 + $0x50] sm:$0xff]
  %v1668 = vld [vmem:[%s1656 + $0x58] sm:$0xff]
  %v1669 = vld [vmem:[%s1656 + $0x60] sm:$0xff]
  %v1670 = vld [vmem:[%s1656 + $0x68] sm:$0xff]
  %v1671 = vld [vmem:[%s1656 + $0x70] sm:$0xff]
  %v1672 = vld [vmem:[%s1656 + $0x78] sm:$0xff]
  %1673 = vmatprep.subr.mxu0 0.0
  %1674 = vmatpush1.msra.mxu0 %v1672
  %1675 = vmatprep.subr.mxu0 0.0
  %1676 = vmatpush1.msra.mxu0 %v1671
  %1677 = vmatprep.subr.mxu0 0.0
  %1678 = vmatpush1.msra.mxu0 %v1670
  %1679 = vmatprep.subr.mxu0 0.0
  %1680 = vmatpush1.msra.mxu0 %v1669
  %1681 = vmatprep.subr.mxu0 0.0
  %1682 = vmatpush1.msra.mxu0 %v1668
  %1683 = vmatprep.subr.mxu0 0.0
  %1684 = vmatpush1.msra.mxu0 %v1667
  %1685 = vmatprep.subr.mxu0 0.0
  %1686 = vmatpush1.msra.mxu0 %v1666
  %1687 = vmatprep.subr.mxu0 0.0
  %1688 = vmatpush1.msra.mxu0 %v1665
  %1689 = vmatprep.subr.mxu0 0.0
  %1690 = vmatpush1.msra.mxu0 %v1664
  %1691 = vmatprep.subr.mxu0 0.0
  %1692 = vmatpush1.msra.mxu0 %v1663
  %1693 = vmatprep.subr.mxu0 0.0
  %1694 = vmatpush1.msra.mxu0 %v1662
  %1695 = vmatprep.subr.mxu0 0.0
  %1696 = vmatpush1.msra.mxu0 %v1661
  %1697 = vmatprep.subr.mxu0 0.0
  %1698 = vmatpush1.msra.mxu0 %v1660
  %1699 = vmatprep.subr.mxu0 0.0
  %1700 = vmatpush1.msra.mxu0 %v1659
  %1701 = vmatprep.subr.mxu0 0.0
  %1702 = vmatpush1.msra.mxu0 %v1658
  %1703 = vmatprep.subr.mxu0 0.0
  %1704 = vmatpush1.msra.mxu0 %v1657
  %1705 = vmatprep.subr.mxu0 0.0
  %1706 = vmatpush2.msra.mxu0 0.0
  %1707 = vmatprep.subr.mxu0 0.0
  %1708 = vmatpush2.msra.mxu0 0.0
  %1709 = vmatprep.subr.mxu0 0.0
  %1710 = vmatpush2.msra.mxu0 0.0
  %1711 = vmatprep.subr.mxu0 0.0
  %1712 = vmatpush2.msra.mxu0 0.0
  %1713 = vmatprep.subr.mxu0 0.0
  %1714 = vmatpush2.msra.mxu0 0.0
  %1715 = vmatprep.subr.mxu0 0.0
  %1716 = vmatpush2.msra.mxu0 0.0
  %1717 = vmatprep.subr.mxu0 0.0
  %1718 = vmatpush2.msra.mxu0 0.0
  %1719 = vmatprep.subr.mxu0 0.0
  %1720 = vmatpush2.msra.mxu0 0.0
  %1721 = vmatprep.subr.mxu0 0.0
  %1722 = vmatpush2.msra.mxu0 0.0
  %1723 = vmatprep.subr.mxu0 0.0
  %1724 = vmatpush2.msra.mxu0 0.0
  %1725 = vmatprep.subr.mxu0 0.0
  %1726 = vmatpush2.msra.mxu0 0.0
  %1727 = vmatprep.subr.mxu0 0.0
  %1728 = vmatpush2.msra.mxu0 0.0
  %1729 = vmatprep.subr.mxu0 0.0
  %1730 = vmatpush2.msra.mxu0 0.0
  %1731 = vmatprep.subr.mxu0 0.0
  %1732 = vmatpush2.msra.mxu0 0.0
  %1733 = vmatprep.subr.mxu0 0.0
  %1734 = vmatpush2.msra.mxu0 0.0
  %1735 = vmatprep.subr.mxu0 0.0
  %1736 = vmatpush2.msra.mxu0 0.0
  %1737 = vmatprep.mubr.f32.mxu0 0.0
  %1738 = vmatmul.mubr.f32.gmra.mxu0 %v1628
  %v1739 = vpop.f32.mrf.mxu0
  %v1740 = vadd.f32 0.0, %v1739
  %v1741 = vpop.f32.mrf.mxu0
  %1742 = vmatprep.mubr.f32.mxu0 0.0
  %1743 = vmatmul.mubr.f32.gmra.mxu0 %v1629
  %v1744 = vpop.f32.mrf.mxu0
  %v1745 = vadd.f32 0.0, %v1744
  %v1746 = vpop.f32.mrf.mxu0
  %1747 = vmatprep.mubr.f32.mxu0 0.0
  %1748 = vmatmul.mubr.f32.gmra.mxu0 %v1630
  %v1749 = vpop.f32.mrf.mxu0
  %v1750 = vadd.f32 0.0, %v1749
  %v1751 = vpop.f32.mrf.mxu0
  %1752 = vmatprep.mubr.f32.mxu0 0.0
  %1753 = vmatmul.mubr.f32.gmra.mxu0 %v1631
  %v1754 = vpop.f32.mrf.mxu0
  %v1755 = vadd.f32 0.0, %v1754
  %v1756 = vpop.f32.mrf.mxu0
  %1757 = vdwg.mxu0
  %1758 = vmatprep.subr.mxu0 0.0
  %1759 = vmatpush1.msra.mxu0 %v1655
  %1760 = vmatprep.subr.mxu0 0.0
  %1761 = vmatpush1.msra.mxu0 %v1654
  %1762 = vmatprep.subr.mxu0 0.0
  %1763 = vmatpush1.msra.mxu0 %v1653
  %1764 = vmatprep.subr.mxu0 0.0
  %1765 = vmatpush1.msra.mxu0 %v1652
  %1766 = vmatprep.subr.mxu0 0.0
  %1767 = vmatpush1.msra.mxu0 %v1651
  %1768 = vmatprep.subr.mxu0 0.0
  %1769 = vmatpush1.msra.mxu0 %v1650
  %1770 = vmatprep.subr.mxu0 0.0
  %1771 = vmatpush1.msra.mxu0 %v1649
  %1772 = vmatprep.subr.mxu0 0.0
  %1773 = vmatpush1.msra.mxu0 %v1648
  %1774 = vmatprep.subr.mxu0 0.0
  %1775 = vmatpush1.msra.mxu0 %v1647
  %1776 = vmatprep.subr.mxu0 0.0
  %1777 = vmatpush1.msra.mxu0 %v1646
  %1778 = vmatprep.subr.mxu0 0.0
  %1779 = vmatpush1.msra.mxu0 %v1645
  %1780 = vmatprep.subr.mxu0 0.0
  %1781 = vmatpush1.msra.mxu0 %v1644
  %1782 = vmatprep.subr.mxu0 0.0
  %1783 = vmatpush1.msra.mxu0 %v1643
  %1784 = vmatprep.subr.mxu0 0.0
  %1785 = vmatpush1.msra.mxu0 %v1642
  %1786 = vmatprep.subr.mxu0 0.0
  %1787 = vmatpush1.msra.mxu0 %v1641
  %1788 = vmatprep.subr.mxu0 0.0
  %1789 = vmatpush1.msra.mxu0 %v1640
  %1790 = vmatprep.subr.mxu0 0.0
  %1791 = vmatpush2.msra.mxu0 0.0
  %1792 = vmatprep.subr.mxu0 0.0
  %1793 = vmatpush2.msra.mxu0 0.0
  %1794 = vmatprep.subr.mxu0 0.0
  %1795 = vmatpush2.msra.mxu0 0.0
  %1796 = vmatprep.subr.mxu0 0.0
  %1797 = vmatpush2.msra.mxu0 0.0
  %1798 = vmatprep.subr.mxu0 0.0
  %1799 = vmatpush2.msra.mxu0 0.0
  %1800 = vmatprep.subr.mxu0 0.0
  %1801 = vmatpush2.msra.mxu0 0.0
  %1802 = vmatprep.subr.mxu0 0.0
  %1803 = vmatpush2.msra.mxu0 0.0
  %1804 = vmatprep.subr.mxu0 0.0
  %1805 = vmatpush2.msra.mxu0 0.0
  %1806 = vmatprep.subr.mxu0 0.0
  %1807 = vmatpush2.msra.mxu0 0.0
  %1808 = vmatprep.subr.mxu0 0.0
  %1809 = vmatpush2.msra.mxu0 0.0
  %1810 = vmatprep.subr.mxu0 0.0
  %1811 = vmatpush2.msra.mxu0 0.0
  %1812 = vmatprep.subr.mxu0 0.0
  %1813 = vmatpush2.msra.mxu0 0.0
  %1814 = vmatprep.subr.mxu0 0.0
  %1815 = vmatpush2.msra.mxu0 0.0
  %1816 = vmatprep.subr.mxu0 0.0
  %1817 = vmatpush2.msra.mxu0 0.0
  %1818 = vmatprep.subr.mxu0 0.0
  %1819 = vmatpush2.msra.mxu0 0.0
  %1820 = vmatprep.subr.mxu0 0.0
  %1821 = vmatpush2.msra.mxu0 0.0
  %1822 = vmatprep.mubr.f32.mxu0 0.0
  %1823 = vmatmul.mubr.f32.gmra.mxu0 %v1624
  %v1824 = vpop.f32.mrf.mxu0
  %v1825 = vadd.f32 %v1740, %v1824
  %v1826 = vpop.f32.mrf.mxu0
  %1827 = vmatprep.mubr.f32.mxu0 0.0
  %1828 = vmatmul.mubr.f32.gmra.mxu0 %v1625
  %v1829 = vpop.f32.mrf.mxu0
  %v1830 = vadd.f32 %v1745, %v1829
  %v1831 = vpop.f32.mrf.mxu0
  %1832 = vmatprep.mubr.f32.mxu0 0.0
  %1833 = vmatmul.mubr.f32.gmra.mxu0 %v1626
  %v1834 = vpop.f32.mrf.mxu0
  %v1835 = vadd.f32 %v1750, %v1834
  %v1836 = vpop.f32.mrf.mxu0
  %1837 = vmatprep.mubr.f32.mxu0 0.0
  %1838 = vmatmul.mubr.f32.gmra.mxu0 %v1627
  %v1839 = vpop.f32.mrf.mxu0
  %v1840 = vadd.f32 %v1755, %v1839
  %v1841 = vpop.f32.mrf.mxu0
  %1842 = vdwg.mxu0
  %s1843 = scalar_lea.vmem %s5, 256
  %v1844 = vld [vmem:[%s1843] sm:$0xff]
  %v1845 = vld [vmem:[%s1843 + $0x8] sm:$0xff]
  %v1846 = vld [vmem:[%s1843 + $0x10] sm:$0xff]
  %v1847 = vld [vmem:[%s1843 + $0x18] sm:$0xff]
  %v1848 = vld [vmem:[%s1843 + $0x20] sm:$0xff]
  %v1849 = vld [vmem:[%s1843 + $0x28] sm:$0xff]
  %v1850 = vld [vmem:[%s1843 + $0x30] sm:$0xff]
  %v1851 = vld [vmem:[%s1843 + $0x38] sm:$0xff]
  %v1852 = vld [vmem:[%s1843 + $0x40] sm:$0xff]
  %v1853 = vld [vmem:[%s1843 + $0x48] sm:$0xff]
  %v1854 = vld [vmem:[%s1843 + $0x50] sm:$0xff]
  %v1855 = vld [vmem:[%s1843 + $0x58] sm:$0xff]
  %v1856 = vld [vmem:[%s1843 + $0x60] sm:$0xff]
  %v1857 = vld [vmem:[%s1843 + $0x68] sm:$0xff]
  %v1858 = vld [vmem:[%s1843 + $0x70] sm:$0xff]
  %v1859 = vld [vmem:[%s1843 + $0x78] sm:$0xff]
  %1860 = vmatprep.subr.mxu0 0.0
  %1861 = vmatpush1.msra.mxu0 %v1859
  %1862 = vmatprep.subr.mxu0 0.0
  %1863 = vmatpush1.msra.mxu0 %v1858
  %1864 = vmatprep.subr.mxu0 0.0
  %1865 = vmatpush1.msra.mxu0 %v1857
  %1866 = vmatprep.subr.mxu0 0.0
  %1867 = vmatpush1.msra.mxu0 %v1856
  %1868 = vmatprep.subr.mxu0 0.0
  %1869 = vmatpush1.msra.mxu0 %v1855
  %1870 = vmatprep.subr.mxu0 0.0
  %1871 = vmatpush1.msra.mxu0 %v1854
  %1872 = vmatprep.subr.mxu0 0.0
  %1873 = vmatpush1.msra.mxu0 %v1853
  %1874 = vmatprep.subr.mxu0 0.0
  %1875 = vmatpush1.msra.mxu0 %v1852
  %1876 = vmatprep.subr.mxu0 0.0
  %1877 = vmatpush1.msra.mxu0 %v1851
  %1878 = vmatprep.subr.mxu0 0.0
  %1879 = vmatpush1.msra.mxu0 %v1850
  %1880 = vmatprep.subr.mxu0 0.0
  %1881 = vmatpush1.msra.mxu0 %v1849
  %1882 = vmatprep.subr.mxu0 0.0
  %1883 = vmatpush1.msra.mxu0 %v1848
  %1884 = vmatprep.subr.mxu0 0.0
  %1885 = vmatpush1.msra.mxu0 %v1847
  %1886 = vmatprep.subr.mxu0 0.0
  %1887 = vmatpush1.msra.mxu0 %v1846
  %1888 = vmatprep.subr.mxu0 0.0
  %1889 = vmatpush1.msra.mxu0 %v1845
  %1890 = vmatprep.subr.mxu0 0.0
  %1891 = vmatpush1.msra.mxu0 %v1844
  %1892 = vmatprep.subr.mxu0 0.0
  %1893 = vmatpush2.msra.mxu0 0.0
  %1894 = vmatprep.subr.mxu0 0.0
  %1895 = vmatpush2.msra.mxu0 0.0
  %1896 = vmatprep.subr.mxu0 0.0
  %1897 = vmatpush2.msra.mxu0 0.0
  %1898 = vmatprep.subr.mxu0 0.0
  %1899 = vmatpush2.msra.mxu0 0.0
  %1900 = vmatprep.subr.mxu0 0.0
  %1901 = vmatpush2.msra.mxu0 0.0
  %1902 = vmatprep.subr.mxu0 0.0
  %1903 = vmatpush2.msra.mxu0 0.0
  %1904 = vmatprep.subr.mxu0 0.0
  %1905 = vmatpush2.msra.mxu0 0.0
  %1906 = vmatprep.subr.mxu0 0.0
  %1907 = vmatpush2.msra.mxu0 0.0
  %1908 = vmatprep.subr.mxu0 0.0
  %1909 = vmatpush2.msra.mxu0 0.0
  %1910 = vmatprep.subr.mxu0 0.0
  %1911 = vmatpush2.msra.mxu0 0.0
  %1912 = vmatprep.subr.mxu0 0.0
  %1913 = vmatpush2.msra.mxu0 0.0
  %1914 = vmatprep.subr.mxu0 0.0
  %1915 = vmatpush2.msra.mxu0 0.0
  %1916 = vmatprep.subr.mxu0 0.0
  %1917 = vmatpush2.msra.mxu0 0.0
  %1918 = vmatprep.subr.mxu0 0.0
  %1919 = vmatpush2.msra.mxu0 0.0
  %1920 = vmatprep.subr.mxu0 0.0
  %1921 = vmatpush2.msra.mxu0 0.0
  %1922 = vmatprep.subr.mxu0 0.0
  %1923 = vmatpush2.msra.mxu0 0.0
  %1924 = vmatprep.mubr.f32.mxu0 0.0
  %1925 = vmatmul.mubr.f32.gmra.mxu0 %v1632
  %v1926 = vpop.f32.mrf.mxu0
  %v1927 = vadd.f32 0.0, %v1926
  %v1928 = vpop.f32.mrf.mxu0
  %1929 = vmatprep.mubr.f32.mxu0 0.0
  %1930 = vmatmul.mubr.f32.gmra.mxu0 %v1633
  %v1931 = vpop.f32.mrf.mxu0
  %v1932 = vadd.f32 0.0, %v1931
  %v1933 = vpop.f32.mrf.mxu0
  %1934 = vmatprep.mubr.f32.mxu0 0.0
  %1935 = vmatmul.mubr.f32.gmra.mxu0 %v1634
  %v1936 = vpop.f32.mrf.mxu0
  %v1937 = vadd.f32 0.0, %v1936
  %v1938 = vpop.f32.mrf.mxu0
  %1939 = vmatprep.mubr.f32.mxu0 0.0
  %1940 = vmatmul.mubr.f32.gmra.mxu0 %v1635
  %v1941 = vpop.f32.mrf.mxu0
  %v1942 = vadd.f32 0.0, %v1941
  %v1943 = vpop.f32.mrf.mxu0
  %1944 = vdwg.mxu0
  %v1945 = vadd.f32 %v1825, %v1927
  %v1946 = vadd.f32 %v1830, %v1932
  %v1947 = vadd.f32 %v1835, %v1937
  %v1948 = vadd.f32 %v1840, %v1942
  %s1949 = scalar_lea.vmem %s5, 384
  %v1950 = vld [vmem:[%s1949] sm:$0xff]
  %v1951 = vld [vmem:[%s1949 + $0x8] sm:$0xff]
  %v1952 = vld [vmem:[%s1949 + $0x10] sm:$0xff]
  %v1953 = vld [vmem:[%s1949 + $0x18] sm:$0xff]
  %v1954 = vld [vmem:[%s1949 + $0x20] sm:$0xff]
  %v1955 = vld [vmem:[%s1949 + $0x28] sm:$0xff]
  %v1956 = vld [vmem:[%s1949 + $0x30] sm:$0xff]
  %v1957 = vld [vmem:[%s1949 + $0x38] sm:$0xff]
  %v1958 = vld [vmem:[%s1949 + $0x40] sm:$0xff]
  %v1959 = vld [vmem:[%s1949 + $0x48] sm:$0xff]
  %v1960 = vld [vmem:[%s1949 + $0x50] sm:$0xff]
  %v1961 = vld [vmem:[%s1949 + $0x58] sm:$0xff]
  %v1962 = vld [vmem:[%s1949 + $0x60] sm:$0xff]
  %v1963 = vld [vmem:[%s1949 + $0x68] sm:$0xff]
  %v1964 = vld [vmem:[%s1949 + $0x70] sm:$0xff]
  %v1965 = vld [vmem:[%s1949 + $0x78] sm:$0xff]
  %1966 = vmatprep.subr.mxu0 0.0
  %1967 = vmatpush1.msra.mxu0 %v1965
  %1968 = vmatprep.subr.mxu0 0.0
  %1969 = vmatpush1.msra.mxu0 %v1964
  %1970 = vmatprep.subr.mxu0 0.0
  %1971 = vmatpush1.msra.mxu0 %v1963
  %1972 = vmatprep.subr.mxu0 0.0
  %1973 = vmatpush1.msra.mxu0 %v1962
  %1974 = vmatprep.subr.mxu0 0.0
  %1975 = vmatpush1.msra.mxu0 %v1961
  %1976 = vmatprep.subr.mxu0 0.0
  %1977 = vmatpush1.msra.mxu0 %v1960
  %1978 = vmatprep.subr.mxu0 0.0
  %1979 = vmatpush1.msra.mxu0 %v1959
  %1980 = vmatprep.subr.mxu0 0.0
  %1981 = vmatpush1.msra.mxu0 %v1958
  %1982 = vmatprep.subr.mxu0 0.0
  %1983 = vmatpush1.msra.mxu0 %v1957
  %1984 = vmatprep.subr.mxu0 0.0
  %1985 = vmatpush1.msra.mxu0 %v1956
  %1986 = vmatprep.subr.mxu0 0.0
  %1987 = vmatpush1.msra.mxu0 %v1955
  %1988 = vmatprep.subr.mxu0 0.0
  %1989 = vmatpush1.msra.mxu0 %v1954
  %1990 = vmatprep.subr.mxu0 0.0
  %1991 = vmatpush1.msra.mxu0 %v1953
  %1992 = vmatprep.subr.mxu0 0.0
  %1993 = vmatpush1.msra.mxu0 %v1952
  %1994 = vmatprep.subr.mxu0 0.0
  %1995 = vmatpush1.msra.mxu0 %v1951
  %1996 = vmatprep.subr.mxu0 0.0
  %1997 = vmatpush1.msra.mxu0 %v1950
  %1998 = vmatprep.subr.mxu0 0.0
  %1999 = vmatpush2.msra.mxu0 0.0
  %2000 = vmatprep.subr.mxu0 0.0
  %2001 = vmatpush2.msra.mxu0 0.0
  %2002 = vmatprep.subr.mxu0 0.0
  %2003 = vmatpush2.msra.mxu0 0.0
  %2004 = vmatprep.subr.mxu0 0.0
  %2005 = vmatpush2.msra.mxu0 0.0
  %2006 = vmatprep.subr.mxu0 0.0
  %2007 = vmatpush2.msra.mxu0 0.0
  %2008 = vmatprep.subr.mxu0 0.0
  %2009 = vmatpush2.msra.mxu0 0.0
  %2010 = vmatprep.subr.mxu0 0.0
  %2011 = vmatpush2.msra.mxu0 0.0
  %2012 = vmatprep.subr.mxu0 0.0
  %2013 = vmatpush2.msra.mxu0 0.0
  %2014 = vmatprep.subr.mxu0 0.0
  %2015 = vmatpush2.msra.mxu0 0.0
  %2016 = vmatprep.subr.mxu0 0.0
  %2017 = vmatpush2.msra.mxu0 0.0
  %2018 = vmatprep.subr.mxu0 0.0
  %2019 = vmatpush2.msra.mxu0 0.0
  %2020 = vmatprep.subr.mxu0 0.0
  %2021 = vmatpush2.msra.mxu0 0.0
  %2022 = vmatprep.subr.mxu0 0.0
  %2023 = vmatpush2.msra.mxu0 0.0
  %2024 = vmatprep.subr.mxu0 0.0
  %2025 = vmatpush2.msra.mxu0 0.0
  %2026 = vmatprep.subr.mxu0 0.0
  %2027 = vmatpush2.msra.mxu0 0.0
  %2028 = vmatprep.subr.mxu0 0.0
  %2029 = vmatpush2.msra.mxu0 0.0
  %2030 = vmatprep.mubr.f32.mxu0 0.0
  %2031 = vmatmul.mubr.f32.gmra.mxu0 %v1636
  %v2032 = vpop.f32.mrf.mxu0
  %v2033 = vadd.f32 0.0, %v2032
  %v2034 = vpop.f32.mrf.mxu0
  %2035 = vmatprep.mubr.f32.mxu0 0.0
  %2036 = vmatmul.mubr.f32.gmra.mxu0 %v1637
  %v2037 = vpop.f32.mrf.mxu0
  %v2038 = vadd.f32 0.0, %v2037
  %v2039 = vpop.f32.mrf.mxu0
  %2040 = vmatprep.mubr.f32.mxu0 0.0
  %2041 = vmatmul.mubr.f32.gmra.mxu0 %v1638
  %v2042 = vpop.f32.mrf.mxu0
  %v2043 = vadd.f32 0.0, %v2042
  %v2044 = vpop.f32.mrf.mxu0
  %2045 = vmatprep.mubr.f32.mxu0 0.0
  %2046 = vmatmul.mubr.f32.gmra.mxu0 %v1639
  %v2047 = vpop.f32.mrf.mxu0
  %v2048 = vadd.f32 0.0, %v2047
  %v2049 = vpop.f32.mrf.mxu0
  %2050 = vdwg.mxu0
  %v2051 = vadd.f32 %v1945, %v2033
  %v2052 = vadd.f32 %v1946, %v2038
  %v2053 = vadd.f32 %v1947, %v2043
  %v2054 = vadd.f32 %v1948, %v2048
  %v2055 = vld [vmem:[%s6] sm:$0x1]
  %v2057 = vlaneseq
  %v2058 = vshrl.u32 %v2057, 7
  %v2059 = vsub.s32 0, %v2058
  %v2060 = vrot.slane %v2055, %v2059
  %v2062 = vadd.f32 %v2051, %v2060
  %v2063 = vadd.f32 %v2052, %v2060
  %v2064 = vadd.f32 %v2053, %v2060
  %v2065 = vadd.f32 %v2054, %v2060
  %vm2066 = vcmp.gt.f32.partialorder %v2062, 0.0
  %vm2067 = vcmp.gt.f32.partialorder %v2063, 0.0
  %vm2068 = vcmp.gt.f32.partialorder %v2064, 0.0
  %vm2069 = vcmp.gt.f32.partialorder %v2065, 0.0
  %v2070 = vmul.f32 %v2062, 0.2
  %v2071 = vmul.f32 %v2063, 0.2
  %v2072 = vmul.f32 %v2064, 0.2
  %v2073 = vmul.f32 %v2065, 0.2
  %v2074 = vsel %vm2066, %v2062, %v2070
  %v2075 = vsel %vm2067, %v2063, %v2071
  %v2076 = vsel %vm2068, %v2064, %v2072
  %v2077 = vsel %vm2069, %v2065, %v2073
  %v2078 = vld [vmem:[%s7] sm:$0xff]
  %v2079 = vld [vmem:[%s7 + $0x8] sm:$0xff]
  %v2080 = vld [vmem:[%s7 + $0x10] sm:$0xff]
  %v2081 = vld [vmem:[%s7 + $0x18] sm:$0xff]
  %v2082 = vld [vmem:[%s7 + $0x20] sm:$0xff]
  %v2083 = vld [vmem:[%s7 + $0x28] sm:$0xff]
  %v2084 = vld [vmem:[%s7 + $0x30] sm:$0xff]
  %v2085 = vld [vmem:[%s7 + $0x38] sm:$0xff]
  %v2086 = vld [vmem:[%s7 + $0x40] sm:$0xff]
  %v2087 = vld [vmem:[%s7 + $0x48] sm:$0xff]
  %v2088 = vld [vmem:[%s7 + $0x50] sm:$0xff]
  %v2089 = vld [vmem:[%s7 + $0x58] sm:$0xff]
  %v2090 = vld [vmem:[%s7 + $0x60] sm:$0xff]
  %v2091 = vld [vmem:[%s7 + $0x68] sm:$0xff]
  %v2092 = vld [vmem:[%s7 + $0x70] sm:$0xff]
  %v2093 = vld [vmem:[%s7 + $0x78] sm:$0xff]
  %s2094 = scalar_lea.vmem %s7, 128
  %v2095 = vld [vmem:[%s2094] sm:$0xff]
  %v2096 = vld [vmem:[%s2094 + $0x8] sm:$0xff]
  %v2097 = vld [vmem:[%s2094 + $0x10] sm:$0xff]
  %v2098 = vld [vmem:[%s2094 + $0x18] sm:$0xff]
  %v2099 = vld [vmem:[%s2094 + $0x20] sm:$0xff]
  %v2100 = vld [vmem:[%s2094 + $0x28] sm:$0xff]
  %v2101 = vld [vmem:[%s2094 + $0x30] sm:$0xff]
  %v2102 = vld [vmem:[%s2094 + $0x38] sm:$0xff]
  %v2103 = vld [vmem:[%s2094 + $0x40] sm:$0xff]
  %v2104 = vld [vmem:[%s2094 + $0x48] sm:$0xff]
  %v2105 = vld [vmem:[%s2094 + $0x50] sm:$0xff]
  %v2106 = vld [vmem:[%s2094 + $0x58] sm:$0xff]
  %v2107 = vld [vmem:[%s2094 + $0x60] sm:$0xff]
  %v2108 = vld [vmem:[%s2094 + $0x68] sm:$0xff]
  %v2109 = vld [vmem:[%s2094 + $0x70] sm:$0xff]
  %v2110 = vld [vmem:[%s2094 + $0x78] sm:$0xff]
  %2111 = vmatprep.subr.mxu0 0.0
  %2112 = vmatpush1.msra.mxu0 %v2110
  %2113 = vmatprep.subr.mxu0 0.0
  %2114 = vmatpush1.msra.mxu0 %v2109
  %2115 = vmatprep.subr.mxu0 0.0
  %2116 = vmatpush1.msra.mxu0 %v2108
  %2117 = vmatprep.subr.mxu0 0.0
  %2118 = vmatpush1.msra.mxu0 %v2107
  %2119 = vmatprep.subr.mxu0 0.0
  %2120 = vmatpush1.msra.mxu0 %v2106
  %2121 = vmatprep.subr.mxu0 0.0
  %2122 = vmatpush1.msra.mxu0 %v2105
  %2123 = vmatprep.subr.mxu0 0.0
  %2124 = vmatpush1.msra.mxu0 %v2104
  %2125 = vmatprep.subr.mxu0 0.0
  %2126 = vmatpush1.msra.mxu0 %v2103
  %2127 = vmatprep.subr.mxu0 0.0
  %2128 = vmatpush1.msra.mxu0 %v2102
  %2129 = vmatprep.subr.mxu0 0.0
  %2130 = vmatpush1.msra.mxu0 %v2101
  %2131 = vmatprep.subr.mxu0 0.0
  %2132 = vmatpush1.msra.mxu0 %v2100
  %2133 = vmatprep.subr.mxu0 0.0
  %2134 = vmatpush1.msra.mxu0 %v2099
  %2135 = vmatprep.subr.mxu0 0.0
  %2136 = vmatpush1.msra.mxu0 %v2098
  %2137 = vmatprep.subr.mxu0 0.0
  %2138 = vmatpush1.msra.mxu0 %v2097
  %2139 = vmatprep.subr.mxu0 0.0
  %2140 = vmatpush1.msra.mxu0 %v2096
  %2141 = vmatprep.subr.mxu0 0.0
  %2142 = vmatpush1.msra.mxu0 %v2095
  %2143 = vmatprep.subr.mxu0 0.0
  %2144 = vmatpush2.msra.mxu0 0.0
  %2145 = vmatprep.subr.mxu0 0.0
  %2146 = vmatpush2.msra.mxu0 0.0
  %2147 = vmatprep.subr.mxu0 0.0
  %2148 = vmatpush2.msra.mxu0 0.0
  %2149 = vmatprep.subr.mxu0 0.0
  %2150 = vmatpush2.msra.mxu0 0.0
  %2151 = vmatprep.subr.mxu0 0.0
  %2152 = vmatpush2.msra.mxu0 0.0
  %2153 = vmatprep.subr.mxu0 0.0
  %2154 = vmatpush2.msra.mxu0 0.0
  %2155 = vmatprep.subr.mxu0 0.0
  %2156 = vmatpush2.msra.mxu0 0.0
  %2157 = vmatprep.subr.mxu0 0.0
  %2158 = vmatpush2.msra.mxu0 0.0
  %2159 = vmatprep.subr.mxu0 0.0
  %2160 = vmatpush2.msra.mxu0 0.0
  %2161 = vmatprep.subr.mxu0 0.0
  %2162 = vmatpush2.msra.mxu0 0.0
  %2163 = vmatprep.subr.mxu0 0.0
  %2164 = vmatpush2.msra.mxu0 0.0
  %2165 = vmatprep.subr.mxu0 0.0
  %2166 = vmatpush2.msra.mxu0 0.0
  %2167 = vmatprep.subr.mxu0 0.0
  %2168 = vmatpush2.msra.mxu0 0.0
  %2169 = vmatprep.subr.mxu0 0.0
  %2170 = vmatpush2.msra.mxu0 0.0
  %2171 = vmatprep.subr.mxu0 0.0
  %2172 = vmatpush2.msra.mxu0 0.0
  %2173 = vmatprep.subr.mxu0 0.0
  %2174 = vmatpush2.msra.mxu0 0.0
  %2175 = vmatprep.mubr.f32.mxu0 0.0
  %2176 = vmatmul.mubr.f32.gmra.mxu0 %v2075
  %v2177 = vpop.f32.mrf.mxu0
  %v2178 = vadd.f32 0.0, %v2177
  %v2179 = vpop.f32.mrf.mxu0
  %2180 = vdwg.mxu0
  %2181 = vmatprep.subr.mxu0 0.0
  %2182 = vmatpush1.msra.mxu0 %v2093
  %2183 = vmatprep.subr.mxu0 0.0
  %2184 = vmatpush1.msra.mxu0 %v2092
  %2185 = vmatprep.subr.mxu0 0.0
  %2186 = vmatpush1.msra.mxu0 %v2091
  %2187 = vmatprep.subr.mxu0 0.0
  %2188 = vmatpush1.msra.mxu0 %v2090
  %2189 = vmatprep.subr.mxu0 0.0
  %2190 = vmatpush1.msra.mxu0 %v2089
  %2191 = vmatprep.subr.mxu0 0.0
  %2192 = vmatpush1.msra.mxu0 %v2088
  %2193 = vmatprep.subr.mxu0 0.0
  %2194 = vmatpush1.msra.mxu0 %v2087
  %2195 = vmatprep.subr.mxu0 0.0
  %2196 = vmatpush1.msra.mxu0 %v2086
  %2197 = vmatprep.subr.mxu0 0.0
  %2198 = vmatpush1.msra.mxu0 %v2085
  %2199 = vmatprep.subr.mxu0 0.0
  %2200 = vmatpush1.msra.mxu0 %v2084
  %2201 = vmatprep.subr.mxu0 0.0
  %2202 = vmatpush1.msra.mxu0 %v2083
  %2203 = vmatprep.subr.mxu0 0.0
  %2204 = vmatpush1.msra.mxu0 %v2082
  %2205 = vmatprep.subr.mxu0 0.0
  %2206 = vmatpush1.msra.mxu0 %v2081
  %2207 = vmatprep.subr.mxu0 0.0
  %2208 = vmatpush1.msra.mxu0 %v2080
  %2209 = vmatprep.subr.mxu0 0.0
  %2210 = vmatpush1.msra.mxu0 %v2079
  %2211 = vmatprep.subr.mxu0 0.0
  %2212 = vmatpush1.msra.mxu0 %v2078
  %2213 = vmatprep.subr.mxu0 0.0
  %2214 = vmatpush2.msra.mxu0 0.0
  %2215 = vmatprep.subr.mxu0 0.0
  %2216 = vmatpush2.msra.mxu0 0.0
  %2217 = vmatprep.subr.mxu0 0.0
  %2218 = vmatpush2.msra.mxu0 0.0
  %2219 = vmatprep.subr.mxu0 0.0
  %2220 = vmatpush2.msra.mxu0 0.0
  %2221 = vmatprep.subr.mxu0 0.0
  %2222 = vmatpush2.msra.mxu0 0.0
  %2223 = vmatprep.subr.mxu0 0.0
  %2224 = vmatpush2.msra.mxu0 0.0
  %2225 = vmatprep.subr.mxu0 0.0
  %2226 = vmatpush2.msra.mxu0 0.0
  %2227 = vmatprep.subr.mxu0 0.0
  %2228 = vmatpush2.msra.mxu0 0.0
  %2229 = vmatprep.subr.mxu0 0.0
  %2230 = vmatpush2.msra.mxu0 0.0
  %2231 = vmatprep.subr.mxu0 0.0
  %2232 = vmatpush2.msra.mxu0 0.0
  %2233 = vmatprep.subr.mxu0 0.0
  %2234 = vmatpush2.msra.mxu0 0.0
  %2235 = vmatprep.subr.mxu0 0.0
  %2236 = vmatpush2.msra.mxu0 0.0
  %2237 = vmatprep.subr.mxu0 0.0
  %2238 = vmatpush2.msra.mxu0 0.0
  %2239 = vmatprep.subr.mxu0 0.0
  %2240 = vmatpush2.msra.mxu0 0.0
  %2241 = vmatprep.subr.mxu0 0.0
  %2242 = vmatpush2.msra.mxu0 0.0
  %2243 = vmatprep.subr.mxu0 0.0
  %2244 = vmatpush2.msra.mxu0 0.0
  %2245 = vmatprep.mubr.f32.mxu0 0.0
  %2246 = vmatmul.mubr.f32.gmra.mxu0 %v2074
  %v2247 = vpop.f32.mrf.mxu0
  %v2248 = vadd.f32 %v2178, %v2247
  %v2249 = vpop.f32.mrf.mxu0
  %2250 = vdwg.mxu0
  %s2251 = scalar_lea.vmem %s7, 256
  %v2252 = vld [vmem:[%s2251] sm:$0xff]
  %v2253 = vld [vmem:[%s2251 + $0x8] sm:$0xff]
  %v2254 = vld [vmem:[%s2251 + $0x10] sm:$0xff]
  %v2255 = vld [vmem:[%s2251 + $0x18] sm:$0xff]
  %v2256 = vld [vmem:[%s2251 + $0x20] sm:$0xff]
  %v2257 = vld [vmem:[%s2251 + $0x28] sm:$0xff]
  %v2258 = vld [vmem:[%s2251 + $0x30] sm:$0xff]
  %v2259 = vld [vmem:[%s2251 + $0x38] sm:$0xff]
  %v2260 = vld [vmem:[%s2251 + $0x40] sm:$0xff]
  %v2261 = vld [vmem:[%s2251 + $0x48] sm:$0xff]
  %v2262 = vld [vmem:[%s2251 + $0x50] sm:$0xff]
  %v2263 = vld [vmem:[%s2251 + $0x58] sm:$0xff]
  %v2264 = vld [vmem:[%s2251 + $0x60] sm:$0xff]
  %v2265 = vld [vmem:[%s2251 + $0x68] sm:$0xff]
  %v2266 = vld [vmem:[%s2251 + $0x70] sm:$0xff]
  %v2267 = vld [vmem:[%s2251 + $0x78] sm:$0xff]
  %2268 = vmatprep.subr.mxu0 0.0
  %2269 = vmatpush1.msra.mxu0 %v2267
  %2270 = vmatprep.subr.mxu0 0.0
  %2271 = vmatpush1.msra.mxu0 %v2266
  %2272 = vmatprep.subr.mxu0 0.0
  %2273 = vmatpush1.msra.mxu0 %v2265
  %2274 = vmatprep.subr.mxu0 0.0
  %2275 = vmatpush1.msra.mxu0 %v2264
  %2276 = vmatprep.subr.mxu0 0.0
  %2277 = vmatpush1.msra.mxu0 %v2263
  %2278 = vmatprep.subr.mxu0 0.0
  %2279 = vmatpush1.msra.mxu0 %v2262
  %2280 = vmatprep.subr.mxu0 0.0
  %2281 = vmatpush1.msra.mxu0 %v2261
  %2282 = vmatprep.subr.mxu0 0.0
  %2283 = vmatpush1.msra.mxu0 %v2260
  %2284 = vmatprep.subr.mxu0 0.0
  %2285 = vmatpush1.msra.mxu0 %v2259
  %2286 = vmatprep.subr.mxu0 0.0
  %2287 = vmatpush1.msra.mxu0 %v2258
  %2288 = vmatprep.subr.mxu0 0.0
  %2289 = vmatpush1.msra.mxu0 %v2257
  %2290 = vmatprep.subr.mxu0 0.0
  %2291 = vmatpush1.msra.mxu0 %v2256
  %2292 = vmatprep.subr.mxu0 0.0
  %2293 = vmatpush1.msra.mxu0 %v2255
  %2294 = vmatprep.subr.mxu0 0.0
  %2295 = vmatpush1.msra.mxu0 %v2254
  %2296 = vmatprep.subr.mxu0 0.0
  %2297 = vmatpush1.msra.mxu0 %v2253
  %2298 = vmatprep.subr.mxu0 0.0
  %2299 = vmatpush1.msra.mxu0 %v2252
  %2300 = vmatprep.subr.mxu0 0.0
  %2301 = vmatpush2.msra.mxu0 0.0
  %2302 = vmatprep.subr.mxu0 0.0
  %2303 = vmatpush2.msra.mxu0 0.0
  %2304 = vmatprep.subr.mxu0 0.0
  %2305 = vmatpush2.msra.mxu0 0.0
  %2306 = vmatprep.subr.mxu0 0.0
  %2307 = vmatpush2.msra.mxu0 0.0
  %2308 = vmatprep.subr.mxu0 0.0
  %2309 = vmatpush2.msra.mxu0 0.0
  %2310 = vmatprep.subr.mxu0 0.0
  %2311 = vmatpush2.msra.mxu0 0.0
  %2312 = vmatprep.subr.mxu0 0.0
  %2313 = vmatpush2.msra.mxu0 0.0
  %2314 = vmatprep.subr.mxu0 0.0
  %2315 = vmatpush2.msra.mxu0 0.0
  %2316 = vmatprep.subr.mxu0 0.0
  %2317 = vmatpush2.msra.mxu0 0.0
  %2318 = vmatprep.subr.mxu0 0.0
  %2319 = vmatpush2.msra.mxu0 0.0
  %2320 = vmatprep.subr.mxu0 0.0
  %2321 = vmatpush2.msra.mxu0 0.0
  %2322 = vmatprep.subr.mxu0 0.0
  %2323 = vmatpush2.msra.mxu0 0.0
  %2324 = vmatprep.subr.mxu0 0.0
  %2325 = vmatpush2.msra.mxu0 0.0
  %2326 = vmatprep.subr.mxu0 0.0
  %2327 = vmatpush2.msra.mxu0 0.0
  %2328 = vmatprep.subr.mxu0 0.0
  %2329 = vmatpush2.msra.mxu0 0.0
  %2330 = vmatprep.subr.mxu0 0.0
  %2331 = vmatpush2.msra.mxu0 0.0
  %2332 = vmatprep.mubr.f32.mxu0 0.0
  %2333 = vmatmul.mubr.f32.gmra.mxu0 %v2076
  %v2334 = vpop.f32.mrf.mxu0
  %v2335 = vadd.f32 0.0, %v2334
  %v2336 = vpop.f32.mrf.mxu0
  %2337 = vdwg.mxu0
  %v2338 = vadd.f32 %v2248, %v2335
  %s2339 = scalar_lea.vmem %s7, 384
  %v2340 = vld [vmem:[%s2339] sm:$0xff]
  %v2341 = vld [vmem:[%s2339 + $0x8] sm:$0xff]
  %v2342 = vld [vmem:[%s2339 + $0x10] sm:$0xff]
  %v2343 = vld [vmem:[%s2339 + $0x18] sm:$0xff]
  %v2344 = vld [vmem:[%s2339 + $0x20] sm:$0xff]
  %v2345 = vld [vmem:[%s2339 + $0x28] sm:$0xff]
  %v2346 = vld [vmem:[%s2339 + $0x30] sm:$0xff]
  %v2347 = vld [vmem:[%s2339 + $0x38] sm:$0xff]
  %v2348 = vld [vmem:[%s2339 + $0x40] sm:$0xff]
  %v2349 = vld [vmem:[%s2339 + $0x48] sm:$0xff]
  %v2350 = vld [vmem:[%s2339 + $0x50] sm:$0xff]
  %v2351 = vld [vmem:[%s2339 + $0x58] sm:$0xff]
  %v2352 = vld [vmem:[%s2339 + $0x60] sm:$0xff]
  %v2353 = vld [vmem:[%s2339 + $0x68] sm:$0xff]
  %v2354 = vld [vmem:[%s2339 + $0x70] sm:$0xff]
  %v2355 = vld [vmem:[%s2339 + $0x78] sm:$0xff]
  %2356 = vmatprep.subr.mxu0 0.0
  %2357 = vmatpush1.msra.mxu0 %v2355
  %2358 = vmatprep.subr.mxu0 0.0
  %2359 = vmatpush1.msra.mxu0 %v2354
  %2360 = vmatprep.subr.mxu0 0.0
  %2361 = vmatpush1.msra.mxu0 %v2353
  %2362 = vmatprep.subr.mxu0 0.0
  %2363 = vmatpush1.msra.mxu0 %v2352
  %2364 = vmatprep.subr.mxu0 0.0
  %2365 = vmatpush1.msra.mxu0 %v2351
  %2366 = vmatprep.subr.mxu0 0.0
  %2367 = vmatpush1.msra.mxu0 %v2350
  %2368 = vmatprep.subr.mxu0 0.0
  %2369 = vmatpush1.msra.mxu0 %v2349
  %2370 = vmatprep.subr.mxu0 0.0
  %2371 = vmatpush1.msra.mxu0 %v2348
  %2372 = vmatprep.subr.mxu0 0.0
  %2373 = vmatpush1.msra.mxu0 %v2347
  %2374 = vmatprep.subr.mxu0 0.0
  %2375 = vmatpush1.msra.mxu0 %v2346
  %2376 = vmatprep.subr.mxu0 0.0
  %2377 = vmatpush1.msra.mxu0 %v2345
  %2378 = vmatprep.subr.mxu0 0.0
  %2379 = vmatpush1.msra.mxu0 %v2344
  %2380 = vmatprep.subr.mxu0 0.0
  %2381 = vmatpush1.msra.mxu0 %v2343
  %2382 = vmatprep.subr.mxu0 0.0
  %2383 = vmatpush1.msra.mxu0 %v2342
  %2384 = vmatprep.subr.mxu0 0.0
  %2385 = vmatpush1.msra.mxu0 %v2341
  %2386 = vmatprep.subr.mxu0 0.0
  %2387 = vmatpush1.msra.mxu0 %v2340
  %2388 = vmatprep.subr.mxu0 0.0
  %2389 = vmatpush2.msra.mxu0 0.0
  %2390 = vmatprep.subr.mxu0 0.0
  %2391 = vmatpush2.msra.mxu0 0.0
  %2392 = vmatprep.subr.mxu0 0.0
  %2393 = vmatpush2.msra.mxu0 0.0
  %2394 = vmatprep.subr.mxu0 0.0
  %2395 = vmatpush2.msra.mxu0 0.0
  %2396 = vmatprep.subr.mxu0 0.0
  %2397 = vmatpush2.msra.mxu0 0.0
  %2398 = vmatprep.subr.mxu0 0.0
  %2399 = vmatpush2.msra.mxu0 0.0
  %2400 = vmatprep.subr.mxu0 0.0
  %2401 = vmatpush2.msra.mxu0 0.0
  %2402 = vmatprep.subr.mxu0 0.0
  %2403 = vmatpush2.msra.mxu0 0.0
  %2404 = vmatprep.subr.mxu0 0.0
  %2405 = vmatpush2.msra.mxu0 0.0
  %2406 = vmatprep.subr.mxu0 0.0
  %2407 = vmatpush2.msra.mxu0 0.0
  %2408 = vmatprep.subr.mxu0 0.0
  %2409 = vmatpush2.msra.mxu0 0.0
  %2410 = vmatprep.subr.mxu0 0.0
  %2411 = vmatpush2.msra.mxu0 0.0
  %2412 = vmatprep.subr.mxu0 0.0
  %2413 = vmatpush2.msra.mxu0 0.0
  %2414 = vmatprep.subr.mxu0 0.0
  %2415 = vmatpush2.msra.mxu0 0.0
  %2416 = vmatprep.subr.mxu0 0.0
  %2417 = vmatpush2.msra.mxu0 0.0
  %2418 = vmatprep.subr.mxu0 0.0
  %2419 = vmatpush2.msra.mxu0 0.0
  %2420 = vmatprep.mubr.f32.mxu0 0.0
  %2421 = vmatmul.mubr.f32.gmra.mxu0 %v2077
  %v2422 = vpop.f32.mrf.mxu0
  %v2423 = vadd.f32 0.0, %v2422
  %v2424 = vpop.f32.mrf.mxu0
  %2425 = vdwg.mxu0
  %v2426 = vadd.f32 %v2338, %v2423
  %v2427 = vld [vmem:[%s8] sm:$0x1]
  %v2429 = vlaneseq
  %v2430 = vshrl.u32 %v2429, 7
  %v2431 = vsub.s32 0, %v2430
  %v2432 = vrot.slane %v2427, %v2431
  %v2434 = vadd.f32 %v2426, %v2432
  %vm2435 = vcmp.gt.f32.partialorder %v2434, 0.0
  %v2436 = vmul.f32 %v2434, 0.2
  %v2437 = vsel %vm2435, %v2434, %v2436
  %v2438 = vld [vmem:[%s9] sm:$0xff]
  %v2439 = vmul.f32 %v2437, %v2438
  %2440 = vadd.xlane.f32.xlu0 %v2439
  %v2441 = vpop.xlane.xlu0 %2440
  %v2442 = vld [vmem:[%s10] sm:$0x3]
  %v2443 = vld [vmem:[#allocation2] sm:$0x1]
  %v2445 = vlaneseq
  %v2446 = vshrl.u32 %v2445, 7
  %v2447 = vsub.s32 0, %v2446
  %v2448 = vrot.slane %v2443, %v2447
  %vm2450 = vcmask 64512
  %v2452 = vsel %vm2450, %v2442, 0
  %2454 = vmatprep.subr.mxu0 0.0
  %2455 = vmatpush1.msra.mxu0 0.0
  %2456 = vmatprep.subr.mxu0 0.0
  %2457 = vmatpush1.msra.mxu0 0.0
  %2458 = vmatprep.subr.mxu0 0.0
  %2459 = vmatpush1.msra.mxu0 0.0
  %2460 = vmatprep.subr.mxu0 0.0
  %2461 = vmatpush1.msra.mxu0 0.0
  %2462 = vmatprep.subr.mxu0 0.0
  %2463 = vmatpush1.msra.mxu0 0.0
  %2464 = vmatprep.subr.mxu0 0.0
  %2465 = vmatpush1.msra.mxu0 0.0
  %2466 = vmatprep.subr.mxu0 0.0
  %2467 = vmatpush1.msra.mxu0 0.0
  %2468 = vmatprep.subr.mxu0 0.0
  %2469 = vmatpush1.msra.mxu0 0.0
  %2470 = vmatprep.subr.mxu0 0.0
  %2471 = vmatpush1.msra.mxu0 0.0
  %2472 = vmatprep.subr.mxu0 0.0
  %2473 = vmatpush1.msra.mxu0 0.0
  %2474 = vmatprep.subr.mxu0 0.0
  %2475 = vmatpush1.msra.mxu0 0.0
  %2476 = vmatprep.subr.mxu0 0.0
  %2477 = vmatpush1.msra.mxu0 0.0
  %2478 = vmatprep.subr.mxu0 0.0
  %2479 = vmatpush1.msra.mxu0 0.0
  %2480 = vmatprep.subr.mxu0 0.0
  %2481 = vmatpush1.msra.mxu0 0.0
  %2482 = vmatprep.subr.mxu0 0.0
  %2483 = vmatpush1.msra.mxu0 0.0
  %2484 = vmatprep.subr.mxu0 0.0
  %2485 = vmatpush1.msra.mxu0 %v2441
  %2486 = vmatprep.subr.mxu0 0.0
  %2487 = vmatpush2.msra.mxu0 0.0
  %2488 = vmatprep.subr.mxu0 0.0
  %2489 = vmatpush2.msra.mxu0 0.0
  %2490 = vmatprep.subr.mxu0 0.0
  %2491 = vmatpush2.msra.mxu0 0.0
  %2492 = vmatprep.subr.mxu0 0.0
  %2493 = vmatpush2.msra.mxu0 0.0
  %2494 = vmatprep.subr.mxu0 0.0
  %2495 = vmatpush2.msra.mxu0 0.0
  %2496 = vmatprep.subr.mxu0 0.0
  %2497 = vmatpush2.msra.mxu0 0.0
  %2498 = vmatprep.subr.mxu0 0.0
  %2499 = vmatpush2.msra.mxu0 0.0
  %2500 = vmatprep.subr.mxu0 0.0
  %2501 = vmatpush2.msra.mxu0 0.0
  %2502 = vmatprep.subr.mxu0 0.0
  %2503 = vmatpush2.msra.mxu0 0.0
  %2504 = vmatprep.subr.mxu0 0.0
  %2505 = vmatpush2.msra.mxu0 0.0
  %2506 = vmatprep.subr.mxu0 0.0
  %2507 = vmatpush2.msra.mxu0 0.0
  %2508 = vmatprep.subr.mxu0 0.0
  %2509 = vmatpush2.msra.mxu0 0.0
  %2510 = vmatprep.subr.mxu0 0.0
  %2511 = vmatpush2.msra.mxu0 0.0
  %2512 = vmatprep.subr.mxu0 0.0
  %2513 = vmatpush2.msra.mxu0 0.0
  %2514 = vmatprep.subr.mxu0 0.0
  %2515 = vmatpush2.msra.mxu0 0.0
  %2516 = vmatprep.subr.mxu0 0.0
  %2517 = vmatpush2.msra.mxu0 0.0
  %2518 = vmatprep.mubr.f32.mxu0 0.0
  %2519 = vmatmul.mubr.f32.gmra.mxu0 %v2452
  %v2520 = vpop.f32.mrf.mxu0
  %v2521 = vadd.f32 %v2448, %v2520
  %v2522 = vpop.f32.mrf.mxu0
  %2523 = vdwg.mxu0
  %v2524 = vxor.u32 %v2521, 2147483648
  %v2525 = vmul.f32 %v2524, 1.442695
  %v2526 = vpow.pop %v2525
  %v2527 = vadd.f32 %v2526, 1.0
  %v2528 = vrcp.pop %v2527
  %v2529 = vmul.f32 1.0, %v2528
  %vm2530 = vcmask 1024
  %2531 = vst.msk [vmem:[%s12] sm:$0x3] %vm2530, %v2529
  // Predicated region
  $region50: #{discriminator_forward.1} parent=0 // pred_check
    _
  $region51: #{discriminator_forward.1} parent=0 // pred_check_branch
    %2533 = sbr.rel (0) target = $region53
  $region52: #{discriminator_forward.1} parent=0 // pred_region
    _
  $region53: #{discriminator_forward.1} parent=0 // pred_fallthru
    _
  // Predicated region
  $region54: #{discriminator_forward.1} parent=0 // pred_check
    _
  $region55: #{discriminator_forward.1} parent=0 // pred_check_branch
    %2535 = sbr.rel (0) target = $region57
  $region56: #{discriminator_forward.1} parent=0 // pred_region
    _
  $region57: #{discriminator_forward.1} parent=0 // pred_fallthru
    _

</llo_original>
